<compile_context>
chip_gen: v7x
topology: tpu7x:2x2x1
jax: 0.10.0
libtpu: 0.0.40
codegen_flags: <defaults>
</compile_context>

<pallas_src>
import jax
import jax.numpy as jnp
from jax.experimental import pallas as pl
from jax.experimental.pallas import tpu as pltpu

_LANES = 128
_DEFAULT_BLOCK_ROWS = 4096            # (4096,256) in + (4096,128) out f32 = 6 MiB per step
_MIN_PALLAS_N = 4096                  # below this the fused XLA elementwise path wins
_VMEM_LIMIT_BYTES = 48 * 1024 * 1024  # fits v5e/v6e (128 MiB) and v7x (64 MiB) physical VMEM


def _round_up(v, m):
    return (v + m - 1) // m * m


def _dim_semantics():
    """Row-grid semantics: explicitly split rows across both TensorCores on v7x."""
    kind = ""
    try:
        kind = jax.devices()[0].device_kind.lower()
    except Exception:
        pass
    if "7" in kind:  # v7x: 2 TensorCores per chip share HBM; split the stream.
        return (getattr(pltpu, "CORE_PARALLEL", getattr(pltpu, "PARALLEL", "parallel")),)
    return (getattr(pltpu, "PARALLEL", "parallel"),)


def identification_kernel(wb_ref, x_ref, o_ref):
    """Fused atomic features + Linear(3,1) for one (TR, 256) interleaved tile.

    wb_ref : SMEM (4,)       f32  [w_sum, w_cos, w_mul, bias]
    x_ref  : VMEM (TR, 256)  f32  lane 2k = x0 of sample k, lane 2k+1 = x1
    o_ref  : VMEM (TR, 128)  f32  one output scalar per sample (lane-dense)
    """
    x = x_ref[...]

    # Deinterleave even/odd lanes into dense (TR, 128) planes with exact 0/1
    # selection matmuls on the idle MXU.  Each output row depends only on the
    # same input row, so Pallas's implicit padding rows stay row-local.
    row = jax.lax.broadcasted_iota(jnp.int32, (2 * _LANES, _LANES), 0)
    col = jax.lax.broadcasted_iota(jnp.int32, (2 * _LANES, _LANES), 1)
    sel_even = (row == 2 * col).astype(jnp.float32)        # picks x0
    sel_odd = (row == 2 * col + 1).astype(jnp.float32)     # picks x1
    x0 = jnp.dot(x, sel_even, precision=jax.lax.Precision.HIGHEST,
                 preferred_element_type=jnp.float32)
    x1 = jnp.dot(x, sel_odd, precision=jax.lax.Precision.HIGHEST,
                 preferred_element_type=jnp.float32)

    f_sum = x0 + x1          # torch.sum(x, dim=1)
    f_cos = jnp.cos(x0)      # torch.cos (unary atomic op on the first feature)
    f_mul = x0 * x1          # torch.prod(x, dim=1)

    # Dropout(p=0.3) in eval/inference mode is identity.
    # TODO(synk): training-mode dropout (Bernoulli mask + 1/(1-p) scaling) not emitted.

    # combination_layer = Linear(3, 1): pure VPU work, no extra MXU needed.
    o_ref[...] = (wb_ref[0] * f_sum
                  + wb_ref[1] * f_cos
                  + wb_ref[2] * f_mul
                  + wb_ref[3])


def _identification_ref(x, w, b):
    """Pure-jnp reference / small-batch fallback (eval-mode dropout == identity)."""
    x = x.astype(jnp.float32)
    x0, x1 = x[:, 0], x[:, 1]
    y = w[0] * (x0 + x1) + w[1] * jnp.cos(x0) + w[2] * (x0 * x1) + b[0]
    return y[:, None]


def identification_forward(x, w, b, *, block_rows=_DEFAULT_BLOCK_ROWS,
                           min_pallas_n=_MIN_PALLAS_N):
    """x: (N, 2) f32, w: (3,) f32, b: (1,) f32 -> (N, 1) f32."""
    x = x.astype(jnp.float32)
    w = w.astype(jnp.float32).reshape(3)
    b = b.astype(jnp.float32).reshape(1)
    n = x.shape[0]

    # Custom-call launch + per-step overhead dwarfs the work at small N.
    if n < min_pallas_n:
        return _identification_ref(x, w, b)

    # One lane-dense interleaved plane: (rows, 256) with 128 samples per row.
    # When N % 128 == 0 this is a free row-major reshape (no HBM copy).
    rem = n % _LANES
    if rem == 0:
        rows = n // _LANES
        x_plane = x.reshape(rows, 2 * _LANES)
    else:
        # Ragged batch: pad only the flat tail up to the next 128-sample
        # boundary (one extra pass in this case only; prefer N % 128 == 0).
        rows = n // _LANES + 1
        pad = rows * _LANES - n
        x_plane = jnp.concatenate(
            [x.reshape(-1), jnp.zeros((2 * pad,), jnp.float32)]).reshape(rows, 2 * _LANES)

    block_rows = max(8, _round_up(int(block_rows), 8))
    tile_rows = min(block_rows, _round_up(rows, 8))      # round-to-8, not next_pow2
    grid_rows = pl.cdiv(rows, tile_rows)                 # ragged last block handled by Pallas

    wb = jnp.concatenate([w, b])                          # (4,) scalars -> SMEM

    out2d = pl.pallas_call(
        identification_kernel,
        out_shape=jax.ShapeDtypeStruct((rows, _LANES), jnp.float32),
        grid=(grid_rows,),
        in_specs=[
            pl.BlockSpec(memory_space=pltpu.SMEM),                     # wb scalars
            pl.BlockSpec((tile_rows, 2 * _LANES), lambda i: (i, 0)),   # interleaved x
        ],
        out_specs=pl.BlockSpec((tile_rows, _LANES), lambda i: (i, 0)),
        compiler_params=pltpu.CompilerParams(
            dimension_semantics=_dim_semantics(),
            vmem_limit_bytes=_VMEM_LIMIT_BYTES),
    )(wb, x_plane)

    # Lane-dense output slab -> (N, 1).  For N % 128 == 0 these reshapes are free.
    out_flat = out2d.reshape(-1)
    if rem != 0:
        out_flat = out_flat[:n]
    return out_flat[:, None]


if __name__ == "__main__":
    key = jax.random.PRNGKey(0)
    kx1, kx2, kx3, kw, kb = jax.random.split(key, 5)

    # combination_layer = Linear(3, 1) params (torch default init bounds).
    bound = 1.0 / jnp.sqrt(3.0)
    w = jax.random.uniform(kw, (3,), jnp.float32, -bound, bound)
    b = jax.random.uniform(kb, (1,), jnp.float32, -bound, bound)

    fwd = jax.jit(identification_forward,
                  static_argnames=("block_rows", "min_pallas_n"))

    # Case 1: clean zero-copy path (N % 128 == 0), multi-step pipelined grid.
    n1 = 8192
    x1 = jax.random.normal(kx1, (n1, 2), dtype=jnp.float32)
    out1 = jax.block_until_ready(fwd(x1, w, b, block_rows=16))
    ref1 = _identification_ref(x1, w, b)
    assert out1.shape == (n1, 1), out1.shape
    assert jnp.allclose(out1, ref1, atol=1e-4, rtol=1e-4)

    # Case 2: ragged batch (N % 128 != 0) -> flat tail pad + partially OOB last block.
    n2 = 4100
    x2 = jax.random.normal(kx2, (n2, 2), dtype=jnp.float32)
    out2 = jax.block_until_ready(fwd(x2, w, b, block_rows=8))
    ref2 = _identification_ref(x2, w, b)
    assert out2.shape == (n2, 1), out2.shape
    assert jnp.allclose(out2, ref2, atol=1e-4, rtol=1e-4)

    # Case 3: tiny batch -> plain-jnp fallback (kernel launch not worth it).
    n3 = 8
    x3 = jax.random.normal(kx3, (n3, 2), dtype=jnp.float32)
    out3 = jax.block_until_ready(fwd(x3, w, b))
    ref3 = _identification_ref(x3, w, b)
    assert out3.shape == (n3, 1), out3.shape
    assert jnp.allclose(out3, ref3, atol=1e-5, rtol=1e-5)

    print("KERNEL_OK")
</pallas_src>

<mosaic_0001>
module attributes {stable_mosaic.version = 11 : i64} {
  func.func @identification_kernel(%arg0: i32, %arg1: memref<4xf32, #tpu.memory_space<smem>>, %arg2: memref<16x256xf32, #tpu.memory_space<vmem>>, %arg3: memref<16x128xf32, #tpu.memory_space<vmem>>) attributes {dimension_semantics = [#tpu.dimension_semantics<parallel>], iteration_bounds = array<i64: 4>, scalar_prefetch = 0 : i64, scratch_operands = 0 : i64, tpu.core_type = #tpu.core_type<tc>, window_params = [{transform_indices = @transform_0, window_bounds = array<i64: 4>}, {transform_indices = @transform_1, window_bounds = array<i64: 16, 256>}, {transform_indices = @transform_2, window_bounds = array<i64: 16, 128>}]} {
    %c0 = arith.constant 0 : index
    %c0_0 = arith.constant 0 : index
    %0 = vector.load %arg2[%c0, %c0_0] : memref<16x256xf32, #tpu.memory_space<vmem>>, vector<16x256xf32>
    %1 = tpu.iota {dimensions = array<i32: 0>} : vector<256x128xi32>
    %2 = tpu.iota {dimensions = array<i32: 1>} : vector<256x128xi32>
    %c2_i32 = arith.constant 2 : i32
    %3 = vector.broadcast %c2_i32 : i32 to vector<256x128xi32>
    %4 = arith.muli %3, %2 : vector<256x128xi32>
    %5 = arith.cmpi eq, %1, %4 : vector<256x128xi32>
    %6 = arith.extui %5 : vector<256x128xi1> to vector<256x128xi32>
    %7 = arith.sitofp %6 : vector<256x128xi32> to vector<256x128xf32>
    %c2_i32_1 = arith.constant 2 : i32
    %8 = vector.broadcast %c2_i32_1 : i32 to vector<256x128xi32>
    %9 = arith.muli %8, %2 : vector<256x128xi32>
    %c1_i32 = arith.constant 1 : i32
    %10 = vector.broadcast %c1_i32 : i32 to vector<256x128xi32>
    %11 = arith.addi %9, %10 : vector<256x128xi32>
    %12 = arith.cmpi eq, %1, %11 : vector<256x128xi32>
    %13 = arith.extui %12 : vector<256x128xi1> to vector<256x128xi32>
    %14 = arith.sitofp %13 : vector<256x128xi32> to vector<256x128xf32>
    %cst = arith.constant dense<0.000000e+00> : vector<16x128xf32>
    %15 = tpu.matmul %0, %7, %cst {dimension_numbers = #tpu.dot_dimension_numbers<[1], [0], [0], [1], [0, 0, 1, 1], [], []>, precision = #tpu.contract_precision<fp32>} : vector<16x256xf32>, vector<256x128xf32>, vector<16x128xf32> -> vector<16x128xf32>
    %cst_2 = arith.constant dense<0.000000e+00> : vector<16x128xf32>
    %16 = tpu.matmul %0, %14, %cst_2 {dimension_numbers = #tpu.dot_dimension_numbers<[1], [0], [0], [1], [0, 0, 1, 1], [], []>, precision = #tpu.contract_precision<fp32>} : vector<16x256xf32>, vector<256x128xf32>, vector<16x128xf32> -> vector<16x128xf32>
    %17 = arith.addf %15, %16 : vector<16x128xf32>
    %18 = math.cos %15 : vector<16x128xf32>
    %19 = arith.mulf %15, %16 : vector<16x128xf32>
    %c0_3 = arith.constant 0 : index
    %20 = memref.load %arg1[%c0_3] : memref<4xf32, #tpu.memory_space<smem>>
    %21 = vector.broadcast %20 : f32 to vector<16x128xf32>
    %22 = arith.mulf %21, %17 : vector<16x128xf32>
    %c1 = arith.constant 1 : index
    %23 = memref.load %arg1[%c1] : memref<4xf32, #tpu.memory_space<smem>>
    %24 = vector.broadcast %23 : f32 to vector<16x128xf32>
    %25 = arith.mulf %24, %18 : vector<16x128xf32>
    %26 = arith.addf %22, %25 : vector<16x128xf32>
    %c2 = arith.constant 2 : index
    %27 = memref.load %arg1[%c2] : memref<4xf32, #tpu.memory_space<smem>>
    %28 = vector.broadcast %27 : f32 to vector<16x128xf32>
    %29 = arith.mulf %28, %19 : vector<16x128xf32>
    %30 = arith.addf %26, %29 : vector<16x128xf32>
    %c3 = arith.constant 3 : index
    %31 = memref.load %arg1[%c3] : memref<4xf32, #tpu.memory_space<smem>>
    %32 = vector.broadcast %31 : f32 to vector<16x128xf32>
    %33 = arith.addf %30, %32 : vector<16x128xf32>
    %c0_4 = arith.constant 0 : index
    %c0_5 = arith.constant 0 : index
    %34 = vector.load %arg3[%c0_4, %c0_5] : memref<16x128xf32, #tpu.memory_space<vmem>>, vector<16x128xf32>
    tpu.vector_store %arg3[%c0_4, %c0_5], %33 {strides = array<i32>} : memref<16x128xf32, #tpu.memory_space<vmem>>, vector<16x128xf32>,
    return
  }
  func.func @transform_0(%arg0: i32) -> i32 {
    %c0_i32 = arith.constant 0 : i32
    %c0_i32_0 = arith.constant 0 : i32
    return %c0_i32 : i32
  }
  func.func @transform_1(%arg0: i32) -> (i32, i32) {
    %c0_i32 = arith.constant 0 : i32
    %c0_i32_0 = arith.constant 0 : i32
    return %arg0, %c0_i32 : i32, i32
  }
  func.func @transform_2(%arg0: i32) -> (i32, i32) {
    %c0_i32 = arith.constant 0 : i32
    %c0_i32_0 = arith.constant 0 : i32
    return %arg0, %c0_i32 : i32, i32
  }
}

</mosaic_0001>

<llo_original>
// kernel: identification_forward.1
$region0: #{identification_forward.1}
  #allocation0 [shape = 'u32[]', space=smem, size = 0x4, offset = 0x4, fixed_abs, tag = 'smem constant byte address 0x4 - core index']
  #allocation1 [shape = 'u32[144,128]{1,0:T(1,128)}', space=vmem, size = 0x12000, scoped, tag = 'internal scratch']
  %s0 = inlined_call_operand.vmem [shape: f32[4], index: 0, kind: input, shape index: {}]
  %s1 = inlined_call_operand.vmem [shape: f32[64,256], index: 1, kind: input, shape index: {}]
  %s2 = inlined_call_operand.hbm [shape: f32[64,128], index: 2, kind: output, shape index: {}]
  %s3 = sld [smem:[#allocation0]]
  $region45: #{identification_forward.1} parent=0
    _
  %s5 = ssub.s32 1, %s3
  %s6 = scalar_select 0, %s5, %s3
  $region1: #{identification_forward.1} parent=0
    #allocation2 [shape = 'u8[512]{0}', space=smem, size = 0x200, scoped, tag = 'input window, operand 0, single buffered']
    #allocation3 [shape = 's32[2]{0}', space=sflag, size = 0x8, scoped, tag = 'scoped memory for identification_forward.1']
    #allocation4 [shape = 's32[2]{0}', space=sflag, size = 0x8, scoped, tag = 'scoped memory for identification_forward.1']
    #allocation5 [shape = 'u8[16384]{0}', space=vmem, size = 0x4000, scoped, tag = 'output window, operand 0']
    %7 = vsyncpa [#allocation4], 0
    %8 = vsyncpa [#allocation3], 0
    %s9 = scalar_lea.sflag [#allocation3], 1
    %10 = vsyncpa %s9, 0
    loop: start=0, step=1, limit=6
    $region2: #{identification_forward.1} parent=1 // loop_pre_header
      _
    $region3: #{identification_forward.1} parent=1 // loop_header
      %s12 = sphi 0, %s16
      %p13 = scmp.ge.s32.totalorder %s12, 6
      %s20 = sphi 0, %s20
      %s22 = sphi 0, %s20
      %s23 = sphi 0, %s22
      %s37 = sphi 0, %s23
      %s43 = sphi 0, %s45
      %s46 = sphi 0, %s43
      %s47 = sphi 0, %s46
      %s63 = sphi 0, %s47
      %s69 = sphi 0, %s71
      %s72 = sphi 0, %s69
      %s73 = sphi 0, %s72
      %s89 = sphi 0, %s73
    $region4: #{identification_forward.1} parent=1 // loop_header_branch
      %15 = sbr.rel (%p13) target = $region8
    $region5: #{identification_forward.1} parent=1 // loop_body
      %s17 = ssub.s32 %s12, 1
      %s18 = ssub.s32 %s12, 2
      %s19 = sadd.s32 %s12, 1
      %s21 = sadd.s32 %s20, 1
      %p24 = scmp.eq.s32.totalorder %s12, 3
      %p25 = scmp.ne.s32.totalorder %s20, %s22
      %p26 = scmp.eq.s32.totalorder %s12, 0
      %p27 = por %p25, %p26
      %p28 = scmp.ne.s32.totalorder %s20, %s22
      %p29 = scmp.eq.s32.totalorder %s17, 3
      %p30 = por %p28, %p29
      %p31 = scmp.ne.s32.totalorder %s22, %s23
      %p32 = scmp.eq.s32.totalorder %s17, 0
      %p33 = por %p31, %p32
      %p34 = scmp.ne.s32.totalorder %s22, %s23
      %p35 = scmp.eq.s32.totalorder %s18, 3
      %p36 = por %p34, %p35
      %p38 = scmp.ne.s32.totalorder %s23, %s37
      %p39 = scmp.eq.s32.totalorder %s18, 0
      %p40 = por %p38, %p39
      %s41 = ssub.s32 %s12, %s19
      %p42 = scmp.eq.s32.totalorder %s41, 0
      %s44 = sadd.s32 %s43, 1
      %s45 = scalar_select %p42, %s43, %s44
      %p48 = pneg %p42
      %p49 = scmp.eq.s32.totalorder %s12, 3
      %p50 = por %p48, %p49
      %p51 = scmp.ne.s32.totalorder %s43, %s46
      %p52 = scmp.eq.s32.totalorder %s12, 0
      %p53 = por %p51, %p52
      %p54 = scmp.ne.s32.totalorder %s43, %s46
      %p55 = scmp.eq.s32.totalorder %s17, 3
      %p56 = por %p54, %p55
      %p57 = scmp.ne.s32.totalorder %s46, %s47
      %p58 = scmp.eq.s32.totalorder %s17, 0
      %p59 = por %p57, %p58
      %p60 = scmp.ne.s32.totalorder %s46, %s47
      %p61 = scmp.eq.s32.totalorder %s18, 3
      %p62 = por %p60, %p61
      %p64 = scmp.ne.s32.totalorder %s47, %s63
      %p65 = scmp.eq.s32.totalorder %s18, 0
      %p66 = por %p64, %p65
      %s67 = ssub.s32 %s12, %s19
      %p68 = scmp.eq.s32.totalorder %s67, 0
      %s70 = sadd.s32 %s69, 1
      %s71 = scalar_select %p68, %s69, %s70
      %p74 = pneg %p68
      %p75 = scmp.eq.s32.totalorder %s12, 3
      %p76 = por %p74, %p75
      %p77 = scmp.ne.s32.totalorder %s69, %s72
      %p78 = scmp.eq.s32.totalorder %s12, 0
      %p79 = por %p77, %p78
      %p80 = scmp.ne.s32.totalorder %s69, %s72
      %p81 = scmp.eq.s32.totalorder %s17, 3
      %p82 = por %p80, %p81
      %p83 = scmp.ne.s32.totalorder %s72, %s73
      %p84 = scmp.eq.s32.totalorder %s17, 0
      %p85 = por %p83, %p84
      %p86 = scmp.ne.s32.totalorder %s72, %s73
      %p87 = scmp.eq.s32.totalorder %s18, 3
      %p88 = por %p86, %p87
      %p90 = scmp.ne.s32.totalorder %s73, %s89
      %p91 = scmp.eq.s32.totalorder %s18, 0
      %p92 = por %p90, %p91
      %p93 = scmp.le.s32.totalorder 1, %s12
      %p94 = scmp.lt.s32.totalorder %s12, 5
      %p95 = pnand %p93, %p94
      %p96 = pneg %p95
      // Predicated region
      $region9: #{identification_forward.1} parent=5 // pred_check
        _
      $region10: #{identification_forward.1} parent=5 // pred_check_branch
        %98 = sbr.rel (%p95) target = $region12
      $region11: #{identification_forward.1} parent=5 // pred_region
        %s99 = ssub.s32 %s12, 1
        // Predicated region
        $region13: #{identification_forward.1} parent=11 // pred_check
          %p100 = pneg %p33
        $region14: #{identification_forward.1} parent=11 // pred_check_branch
          %102 = sbr.rel (%p100) target = $region16
        $region15: #{identification_forward.1} parent=11 // pred_region
          %s104 = ssub.s32 16, 16
          %105 = vsyncadd [#allocation4], %s104
          %s107 = sshll.u32 %s0, 4
          %s108 = int_to_ptr.vmem [resolvable:$true] %s107
          %110 = dma.vmem_to_smem %s108, 16, [#allocation2], [#allocation4]
        $region16: #{identification_forward.1} parent=11 // pred_fallthru
          _
      $region12: #{identification_forward.1} parent=5 // pred_fallthru
        _
      %p111 = scmp.lt.s32.totalorder %s12, 4
      // Predicated region
      $region17: #{identification_forward.1} parent=5 // pred_check
        %p112 = pneg %p111
      $region18: #{identification_forward.1} parent=5 // pred_check_branch
        %114 = sbr.rel (%p112) target = $region20
      $region19: #{identification_forward.1} parent=5 // pred_region
        // Predicated region
        $region21: #{identification_forward.1} parent=19 // pred_check
          %p115 = pneg %p53
        $region22: #{identification_forward.1} parent=19 // pred_check_branch
          %117 = sbr.rel (%p115) target = $region24
        $region23: #{identification_forward.1} parent=19 // pred_region
          %s118 = smul.u32 2, %s12
          %p119 = scmp.lt.s32.totalorder %s118, 7
          %s120 = scalar_select %p119, %s118, 7
          %s121 = smul.addr %s120, 2
          %s122 = smul.addr %s121, 8
          %s123 = scalar_lea.vmem %s1, %s122
          %s124 = smul.u32 2, %s12
        $region24: #{identification_forward.1} parent=19 // pred_fallthru
          _
      $region20: #{identification_forward.1} parent=5 // pred_fallthru
        _
      %p125 = scmp.le.s32.totalorder 1, %s12
      %p126 = scmp.lt.s32.totalorder %s12, 5
      %p127 = pnand %p125, %p126
      %p128 = pneg %p127
      // Predicated region
      $region25: #{identification_forward.1} parent=5 // pred_check
        _
      $region26: #{identification_forward.1} parent=5 // pred_check_branch
        %130 = sbr.rel (%p127) target = $region28
      $region27: #{identification_forward.1} parent=5 // pred_region
        %s131 = ssub.s32 %s12, 1
        // Predicated region
        $region29: #{identification_forward.1} parent=27 // pred_check
          %p132 = pneg %p33
        $region30: #{identification_forward.1} parent=27 // pred_check_branch
          %134 = sbr.rel (%p132) target = $region32
        $region31: #{identification_forward.1} parent=27 // pred_region
          %135 = dma.done [#allocation4], 16
        $region32: #{identification_forward.1} parent=27 // pred_fallthru
          _
        %136 = sfence
        %p137 = pneg %p33
        %p138 = pneg %p30
        %s139 = smul.u32 2, %s17
        %p140 = scmp.lt.s32.totalorder %s139, 7
        %s141 = scalar_select %p140, %s139, 7
        %s142 = smul.addr %s141, 2
        %s143 = smul.addr %s142, 8
        %s144 = scalar_lea.vmem %s1, %s143
        %p145 = pneg %p59
        %p146 = pneg %p56
        %p147 = pneg %p85
        %p148 = pneg %p82
        %s149 = sand.u32 %s72, 1
        %s150 = scalar_lea.sflag [#allocation3], %s149
        %s151 = sand.u32 %s72, 1
        %s152 = smul.addr %s151, 16
        %s153 = scalar_lea.vmem [#allocation5], %s152
        %s154 = smul.u32 2, %s17
        %p155 = scmp.lt.s32.totalorder %s154, 7
        %s156 = scalar_select %p155, %s154, 7
        %s157 = smul.addr %s156, 2
        %s158 = smul.addr %s157, 8
        %s159 = scalar_lea.vmem %s1, %s158
        %s160 = smul.u32 2, %s17
        %s161 = smul.u32 2, %s17
        %v162 = vld [vmem:[%s159] sm:$0xff]
        %v163 = vld [vmem:[%s159 + $0x8] sm:$0xff]
        %v164 = vld [vmem:[%s159 + $0x10] sm:$0xff]
        %v165 = vld [vmem:[%s159 + $0x18] sm:$0xff]
        %v166 = vlaneseq
        %v167 = vshrl.u32 %v166, 7
        %v168 = vadd.s32 %v167, 8
        %v169 = vadd.s32 %v167, 16
        %v170 = vadd.s32 %v167, 24
        %v171 = vadd.s32 %v167, 32
        %v172 = vadd.s32 %v167, 40
        %v173 = vadd.s32 %v167, 48
        %v174 = vadd.s32 %v167, 56
        %v175 = vadd.s32 %v167, 64
        %v176 = vadd.s32 %v167, 72
        %v177 = vadd.s32 %v167, 80
        %v178 = vadd.s32 %v167, 88
        %v179 = vadd.s32 %v167, 96
        %v180 = vadd.s32 %v167, 104
        %v181 = vadd.s32 %v167, 112
        %v182 = vadd.s32 %v167, 120
        %v183 = vadd.s32 %v167, 128
        %v184 = vadd.s32 %v167, 136
        %v185 = vadd.s32 %v167, 144
        %v186 = vadd.s32 %v167, 152
        %v187 = vadd.s32 %v167, 160
        %v188 = vadd.s32 %v167, 168
        %v189 = vadd.s32 %v167, 176
        %v190 = vadd.s32 %v167, 184
        %v191 = vadd.s32 %v167, 192
        %v192 = vadd.s32 %v167, 200
        %v193 = vadd.s32 %v167, 208
        %v194 = vadd.s32 %v167, 216
        %v195 = vadd.s32 %v167, 224
        %v196 = vadd.s32 %v167, 232
        %v197 = vadd.s32 %v167, 240
        %v198 = vadd.s32 %v167, 248
        %v199 = vlaneseq
        %v200 = vand.u32 %v199, 127
        %v201 = vmul.u32 %v200, 2
        %vm202 = vcmp.eq.s32.totalorder %v167, %v201
        %vm203 = vcmp.eq.s32.totalorder %v168, %v201
        %vm204 = vcmp.eq.s32.totalorder %v169, %v201
        %vm205 = vcmp.eq.s32.totalorder %v170, %v201
        %vm206 = vcmp.eq.s32.totalorder %v171, %v201
        %vm207 = vcmp.eq.s32.totalorder %v172, %v201
        %vm208 = vcmp.eq.s32.totalorder %v173, %v201
        %vm209 = vcmp.eq.s32.totalorder %v174, %v201
        %vm210 = vcmp.eq.s32.totalorder %v175, %v201
        %vm211 = vcmp.eq.s32.totalorder %v176, %v201
        %vm212 = vcmp.eq.s32.totalorder %v177, %v201
        %vm213 = vcmp.eq.s32.totalorder %v178, %v201
        %vm214 = vcmp.eq.s32.totalorder %v179, %v201
        %vm215 = vcmp.eq.s32.totalorder %v180, %v201
        %vm216 = vcmp.eq.s32.totalorder %v181, %v201
        %vm217 = vcmp.eq.s32.totalorder %v182, %v201
        %vm218 = vcmp.eq.s32.totalorder %v183, %v201
        %vm219 = vcmp.eq.s32.totalorder %v184, %v201
        %vm220 = vcmp.eq.s32.totalorder %v185, %v201
        %vm221 = vcmp.eq.s32.totalorder %v186, %v201
        %vm222 = vcmp.eq.s32.totalorder %v187, %v201
        %vm223 = vcmp.eq.s32.totalorder %v188, %v201
        %vm224 = vcmp.eq.s32.totalorder %v189, %v201
        %vm225 = vcmp.eq.s32.totalorder %v190, %v201
        %vm226 = vcmp.eq.s32.totalorder %v191, %v201
        %vm227 = vcmp.eq.s32.totalorder %v192, %v201
        %vm228 = vcmp.eq.s32.totalorder %v193, %v201
        %vm229 = vcmp.eq.s32.totalorder %v194, %v201
        %vm230 = vcmp.eq.s32.totalorder %v195, %v201
        %vm231 = vcmp.eq.s32.totalorder %v196, %v201
        %vm232 = vcmp.eq.s32.totalorder %v197, %v201
        %vm233 = vcmp.eq.s32.totalorder %v198, %v201
        %v234 = vsel %vm202, 1, 0
        %v235 = vsel %vm203, 1, 0
        %v236 = vsel %vm204, 1, 0
        %v237 = vsel %vm205, 1, 0
        %v238 = vsel %vm206, 1, 0
        %v239 = vsel %vm207, 1, 0
        %v240 = vsel %vm208, 1, 0
        %v241 = vsel %vm209, 1, 0
        %v242 = vsel %vm210, 1, 0
        %v243 = vsel %vm211, 1, 0
        %v244 = vsel %vm212, 1, 0
        %v245 = vsel %vm213, 1, 0
        %v246 = vsel %vm214, 1, 0
        %v247 = vsel %vm215, 1, 0
        %v248 = vsel %vm216, 1, 0
        %v249 = vsel %vm217, 1, 0
        %v250 = vsel %vm218, 1, 0
        %v251 = vsel %vm219, 1, 0
        %v252 = vsel %vm220, 1, 0
        %v253 = vsel %vm221, 1, 0
        %v254 = vsel %vm222, 1, 0
        %v255 = vsel %vm223, 1, 0
        %v256 = vsel %vm224, 1, 0
        %v257 = vsel %vm225, 1, 0
        %v258 = vsel %vm226, 1, 0
        %v259 = vsel %vm227, 1, 0
        %v260 = vsel %vm228, 1, 0
        %v261 = vsel %vm229, 1, 0
        %v262 = vsel %vm230, 1, 0
        %v263 = vsel %vm231, 1, 0
        %v264 = vsel %vm232, 1, 0
        %v265 = vsel %vm233, 1, 0
        %v266 = vcvt.s32.f32 %v234
        %v267 = vcvt.s32.f32 %v235
        %v268 = vcvt.s32.f32 %v236
        %v269 = vcvt.s32.f32 %v237
        %v270 = vcvt.s32.f32 %v238
        %v271 = vcvt.s32.f32 %v239
        %v272 = vcvt.s32.f32 %v240
        %v273 = vcvt.s32.f32 %v241
        %v274 = vcvt.s32.f32 %v242
        %v275 = vcvt.s32.f32 %v243
        %v276 = vcvt.s32.f32 %v244
        %v277 = vcvt.s32.f32 %v245
        %v278 = vcvt.s32.f32 %v246
        %v279 = vcvt.s32.f32 %v247
        %v280 = vcvt.s32.f32 %v248
        %v281 = vcvt.s32.f32 %v249
        %v282 = vcvt.s32.f32 %v250
        %v283 = vcvt.s32.f32 %v251
        %v284 = vcvt.s32.f32 %v252
        %v285 = vcvt.s32.f32 %v253
        %v286 = vcvt.s32.f32 %v254
        %v287 = vcvt.s32.f32 %v255
        %v288 = vcvt.s32.f32 %v256
        %v289 = vcvt.s32.f32 %v257
        %v290 = vcvt.s32.f32 %v258
        %v291 = vcvt.s32.f32 %v259
        %v292 = vcvt.s32.f32 %v260
        %v293 = vcvt.s32.f32 %v261
        %v294 = vcvt.s32.f32 %v262
        %v295 = vcvt.s32.f32 %v263
        %v296 = vcvt.s32.f32 %v264
        %v297 = vcvt.s32.f32 %v265
        %v298 = vadd.s32 %v201, 1
        %vm299 = vcmp.eq.s32.totalorder %v167, %v298
        %vm300 = vcmp.eq.s32.totalorder %v168, %v298
        %vm301 = vcmp.eq.s32.totalorder %v169, %v298
        %vm302 = vcmp.eq.s32.totalorder %v170, %v298
        %vm303 = vcmp.eq.s32.totalorder %v171, %v298
        %vm304 = vcmp.eq.s32.totalorder %v172, %v298
        %vm305 = vcmp.eq.s32.totalorder %v173, %v298
        %vm306 = vcmp.eq.s32.totalorder %v174, %v298
        %vm307 = vcmp.eq.s32.totalorder %v175, %v298
        %vm308 = vcmp.eq.s32.totalorder %v176, %v298
        %vm309 = vcmp.eq.s32.totalorder %v177, %v298
        %vm310 = vcmp.eq.s32.totalorder %v178, %v298
        %vm311 = vcmp.eq.s32.totalorder %v179, %v298
        %vm312 = vcmp.eq.s32.totalorder %v180, %v298
        %vm313 = vcmp.eq.s32.totalorder %v181, %v298
        %vm314 = vcmp.eq.s32.totalorder %v182, %v298
        %vm315 = vcmp.eq.s32.totalorder %v183, %v298
        %vm316 = vcmp.eq.s32.totalorder %v184, %v298
        %vm317 = vcmp.eq.s32.totalorder %v185, %v298
        %vm318 = vcmp.eq.s32.totalorder %v186, %v298
        %vm319 = vcmp.eq.s32.totalorder %v187, %v298
        %vm320 = vcmp.eq.s32.totalorder %v188, %v298
        %vm321 = vcmp.eq.s32.totalorder %v189, %v298
        %vm322 = vcmp.eq.s32.totalorder %v190, %v298
        %vm323 = vcmp.eq.s32.totalorder %v191, %v298
        %vm324 = vcmp.eq.s32.totalorder %v192, %v298
        %vm325 = vcmp.eq.s32.totalorder %v193, %v298
        %vm326 = vcmp.eq.s32.totalorder %v194, %v298
        %vm327 = vcmp.eq.s32.totalorder %v195, %v298
        %vm328 = vcmp.eq.s32.totalorder %v196, %v298
        %vm329 = vcmp.eq.s32.totalorder %v197, %v298
        %vm330 = vcmp.eq.s32.totalorder %v198, %v298
        %v331 = vsel %vm299, 1, 0
        %v332 = vsel %vm300, 1, 0
        %v333 = vsel %vm301, 1, 0
        %v334 = vsel %vm302, 1, 0
        %v335 = vsel %vm303, 1, 0
        %v336 = vsel %vm304, 1, 0
        %v337 = vsel %vm305, 1, 0
        %v338 = vsel %vm306, 1, 0
        %v339 = vsel %vm307, 1, 0
        %v340 = vsel %vm308, 1, 0
        %v341 = vsel %vm309, 1, 0
        %v342 = vsel %vm310, 1, 0
        %v343 = vsel %vm311, 1, 0
        %v344 = vsel %vm312, 1, 0
        %v345 = vsel %vm313, 1, 0
        %v346 = vsel %vm314, 1, 0
        %v347 = vsel %vm315, 1, 0
        %v348 = vsel %vm316, 1, 0
        %v349 = vsel %vm317, 1, 0
        %v350 = vsel %vm318, 1, 0
        %v351 = vsel %vm319, 1, 0
        %v352 = vsel %vm320, 1, 0
        %v353 = vsel %vm321, 1, 0
        %v354 = vsel %vm322, 1, 0
        %v355 = vsel %vm323, 1, 0
        %v356 = vsel %vm324, 1, 0
        %v357 = vsel %vm325, 1, 0
        %v358 = vsel %vm326, 1, 0
        %v359 = vsel %vm327, 1, 0
        %v360 = vsel %vm328, 1, 0
        %v361 = vsel %vm329, 1, 0
        %v362 = vsel %vm330, 1, 0
        %v363 = vcvt.s32.f32 %v331
        %v364 = vcvt.s32.f32 %v332
        %v365 = vcvt.s32.f32 %v333
        %v366 = vcvt.s32.f32 %v334
        %v367 = vcvt.s32.f32 %v335
        %v368 = vcvt.s32.f32 %v336
        %v369 = vcvt.s32.f32 %v337
        %v370 = vcvt.s32.f32 %v338
        %v371 = vcvt.s32.f32 %v339
        %v372 = vcvt.s32.f32 %v340
        %v373 = vcvt.s32.f32 %v341
        %v374 = vcvt.s32.f32 %v342
        %v375 = vcvt.s32.f32 %v343
        %v376 = vcvt.s32.f32 %v344
        %v377 = vcvt.s32.f32 %v345
        %v378 = vcvt.s32.f32 %v346
        %v379 = vcvt.s32.f32 %v347
        %v380 = vcvt.s32.f32 %v348
        %v381 = vcvt.s32.f32 %v349
        %v382 = vcvt.s32.f32 %v350
        %v383 = vcvt.s32.f32 %v351
        %v384 = vcvt.s32.f32 %v352
        %v385 = vcvt.s32.f32 %v353
        %v386 = vcvt.s32.f32 %v354
        %v387 = vcvt.s32.f32 %v355
        %v388 = vcvt.s32.f32 %v356
        %v389 = vcvt.s32.f32 %v357
        %v390 = vcvt.s32.f32 %v358
        %v391 = vcvt.s32.f32 %v359
        %v392 = vcvt.s32.f32 %v360
        %v393 = vcvt.s32.f32 %v361
        %v394 = vcvt.s32.f32 %v362
        %395 = vmatprep.subr.mxu0 0.0
        %v396 = vand.u32 %v266, 4294901760
        %397 = vmatpush1.msra.mxu0 %v396
        %398 = vmatprep.subr.mxu0 0.0
        %v399 = vand.u32 %v267, 4294901760
        %400 = vmatpush1.msra.mxu0 %v399
        %401 = vmatprep.subr.mxu0 0.0
        %v402 = vand.u32 %v268, 4294901760
        %403 = vmatpush1.msra.mxu0 %v402
        %404 = vmatprep.subr.mxu0 0.0
        %v405 = vand.u32 %v269, 4294901760
        %406 = vmatpush1.msra.mxu0 %v405
        %407 = vmatprep.subr.mxu0 0.0
        %v408 = vand.u32 %v270, 4294901760
        %409 = vmatpush1.msra.mxu0 %v408
        %410 = vmatprep.subr.mxu0 0.0
        %v411 = vand.u32 %v271, 4294901760
        %412 = vmatpush1.msra.mxu0 %v411
        %413 = vmatprep.subr.mxu0 0.0
        %v414 = vand.u32 %v272, 4294901760
        %415 = vmatpush1.msra.mxu0 %v414
        %416 = vmatprep.subr.mxu0 0.0
        %v417 = vand.u32 %v273, 4294901760
        %418 = vmatpush1.msra.mxu0 %v417
        %419 = vmatprep.subr.mxu0 0.0
        %v420 = vand.u32 %v274, 4294901760
        %421 = vmatpush1.msra.mxu0 %v420
        %422 = vmatprep.subr.mxu0 0.0
        %v423 = vand.u32 %v275, 4294901760
        %424 = vmatpush1.msra.mxu0 %v423
        %425 = vmatprep.subr.mxu0 0.0
        %v426 = vand.u32 %v276, 4294901760
        %427 = vmatpush1.msra.mxu0 %v426
        %428 = vmatprep.subr.mxu0 0.0
        %v429 = vand.u32 %v277, 4294901760
        %430 = vmatpush1.msra.mxu0 %v429
        %431 = vmatprep.subr.mxu0 0.0
        %v432 = vand.u32 %v278, 4294901760
        %433 = vmatpush1.msra.mxu0 %v432
        %434 = vmatprep.subr.mxu0 0.0
        %v435 = vand.u32 %v279, 4294901760
        %436 = vmatpush1.msra.mxu0 %v435
        %437 = vmatprep.subr.mxu0 0.0
        %v438 = vand.u32 %v280, 4294901760
        %439 = vmatpush1.msra.mxu0 %v438
        %440 = vmatprep.subr.mxu0 0.0
        %v441 = vand.u32 %v281, 4294901760
        %442 = vmatpush1.msra.mxu0 %v441
        %443 = vmatprep.subr.mxu0 0.0
        %v444 = vand.u32 %v282, 4294901760
        %445 = vmatpush1.msra.mxu0 %v444
        %446 = vmatprep.subr.mxu0 0.0
        %v447 = vand.u32 %v283, 4294901760
        %448 = vmatpush1.msra.mxu0 %v447
        %449 = vmatprep.subr.mxu0 0.0
        %v450 = vand.u32 %v284, 4294901760
        %451 = vmatpush1.msra.mxu0 %v450
        %452 = vmatprep.subr.mxu0 0.0
        %v453 = vand.u32 %v285, 4294901760
        %454 = vmatpush1.msra.mxu0 %v453
        %455 = vmatprep.subr.mxu0 0.0
        %v456 = vand.u32 %v286, 4294901760
        %457 = vmatpush1.msra.mxu0 %v456
        %458 = vmatprep.subr.mxu0 0.0
        %v459 = vand.u32 %v287, 4294901760
        %460 = vmatpush1.msra.mxu0 %v459
        %461 = vmatprep.subr.mxu0 0.0
        %v462 = vand.u32 %v288, 4294901760
        %463 = vmatpush1.msra.mxu0 %v462
        %464 = vmatprep.subr.mxu0 0.0
        %v465 = vand.u32 %v289, 4294901760
        %466 = vmatpush1.msra.mxu0 %v465
        %467 = vmatprep.subr.mxu0 0.0
        %v468 = vand.u32 %v290, 4294901760
        %469 = vmatpush1.msra.mxu0 %v468
        %470 = vmatprep.subr.mxu0 0.0
        %v471 = vand.u32 %v291, 4294901760
        %472 = vmatpush1.msra.mxu0 %v471
        %473 = vmatprep.subr.mxu0 0.0
        %v474 = vand.u32 %v292, 4294901760
        %475 = vmatpush1.msra.mxu0 %v474
        %476 = vmatprep.subr.mxu0 0.0
        %v477 = vand.u32 %v293, 4294901760
        %478 = vmatpush1.msra.mxu0 %v477
        %479 = vmatprep.subr.mxu0 0.0
        %v480 = vand.u32 %v294, 4294901760
        %481 = vmatpush1.msra.mxu0 %v480
        %482 = vmatprep.subr.mxu0 0.0
        %v483 = vand.u32 %v295, 4294901760
        %484 = vmatpush1.msra.mxu0 %v483
        %485 = vmatprep.subr.mxu0 0.0
        %v486 = vand.u32 %v296, 4294901760
        %487 = vmatpush1.msra.mxu0 %v486
        %488 = vmatprep.subr.mxu0 0.0
        %v489 = vand.u32 %v297, 4294901760
        %490 = vmatpush1.msra.mxu0 %v489
        %v491 = vand.u32 %v163, 4294901760
        %v492 = vsub.f32 %v163, %v491
        %v493 = vand.u32 %v492, 4294901760
        %v494 = vsub.f32 %v492, %v493
        %v495 = vand.u32 %v494, 4294901760
        %496 = vmatprep.mubr.f32.mxu0 %v495
        %v497 = vand.u32 %v162, 4294901760
        %v498 = vsub.f32 %v162, %v497
        %v499 = vand.u32 %v498, 4294901760
        %v500 = vsub.f32 %v498, %v499
        %v501 = vand.u32 %v500, 4294901760
        %502 = vmatmul.mubr.f32.gmra.mrb[0].mxu0 %v501
        %v503 = vpop.f32.mrb[0].mxu0
        %v504 = vadd.f32 0.0, %v503
        %v505 = vpop.f32.mrb[0].mxu0
        %v506 = vand.u32 %v165, 4294901760
        %v507 = vsub.f32 %v165, %v506
        %v508 = vand.u32 %v507, 4294901760
        %v509 = vsub.f32 %v507, %v508
        %v510 = vand.u32 %v509, 4294901760
        %511 = vmatprep.mubr.f32.mxu0 %v510
        %v512 = vand.u32 %v164, 4294901760
        %v513 = vsub.f32 %v164, %v512
        %v514 = vand.u32 %v513, 4294901760
        %v515 = vsub.f32 %v513, %v514
        %v516 = vand.u32 %v515, 4294901760
        %517 = vmatmul.mubr.f32.gmra.mrb[0].mxu0 %v516
        %v518 = vpop.f32.mrb[0].mxu0
        %v519 = vadd.f32 0.0, %v518
        %v520 = vpop.f32.mrb[0].mxu0
        %521 = vdwg.mxu0
        %522 = vmatprep.subr.mxu0 0.0
        %v523 = vand.u32 %v266, 4294901760
        %v524 = vsub.f32 %v266, %v523
        %v525 = vand.u32 %v524, 4294901760
        %v526 = vsub.f32 %v524, %v525
        %v527 = vand.u32 %v526, 4294901760
        %528 = vmatpush1.msra.mxu0 %v527
        %529 = vmatprep.subr.mxu0 0.0
        %v530 = vand.u32 %v267, 4294901760
        %v531 = vsub.f32 %v267, %v530
        %v532 = vand.u32 %v531, 4294901760
        %v533 = vsub.f32 %v531, %v532
        %v534 = vand.u32 %v533, 4294901760
        %535 = vmatpush1.msra.mxu0 %v534
        %536 = vmatprep.subr.mxu0 0.0
        %v537 = vand.u32 %v268, 4294901760
        %v538 = vsub.f32 %v268, %v537
        %v539 = vand.u32 %v538, 4294901760
        %v540 = vsub.f32 %v538, %v539
        %v541 = vand.u32 %v540, 4294901760
        %542 = vmatpush1.msra.mxu0 %v541
        %543 = vmatprep.subr.mxu0 0.0
        %v544 = vand.u32 %v269, 4294901760
        %v545 = vsub.f32 %v269, %v544
        %v546 = vand.u32 %v545, 4294901760
        %v547 = vsub.f32 %v545, %v546
        %v548 = vand.u32 %v547, 4294901760
        %549 = vmatpush1.msra.mxu0 %v548
        %550 = vmatprep.subr.mxu0 0.0
        %v551 = vand.u32 %v270, 4294901760
        %v552 = vsub.f32 %v270, %v551
        %v553 = vand.u32 %v552, 4294901760
        %v554 = vsub.f32 %v552, %v553
        %v555 = vand.u32 %v554, 4294901760
        %556 = vmatpush1.msra.mxu0 %v555
        %557 = vmatprep.subr.mxu0 0.0
        %v558 = vand.u32 %v271, 4294901760
        %v559 = vsub.f32 %v271, %v558
        %v560 = vand.u32 %v559, 4294901760
        %v561 = vsub.f32 %v559, %v560
        %v562 = vand.u32 %v561, 4294901760
        %563 = vmatpush1.msra.mxu0 %v562
        %564 = vmatprep.subr.mxu0 0.0
        %v565 = vand.u32 %v272, 4294901760
        %v566 = vsub.f32 %v272, %v565
        %v567 = vand.u32 %v566, 4294901760
        %v568 = vsub.f32 %v566, %v567
        %v569 = vand.u32 %v568, 4294901760
        %570 = vmatpush1.msra.mxu0 %v569
        %571 = vmatprep.subr.mxu0 0.0
        %v572 = vand.u32 %v273, 4294901760
        %v573 = vsub.f32 %v273, %v572
        %v574 = vand.u32 %v573, 4294901760
        %v575 = vsub.f32 %v573, %v574
        %v576 = vand.u32 %v575, 4294901760
        %577 = vmatpush1.msra.mxu0 %v576
        %578 = vmatprep.subr.mxu0 0.0
        %v579 = vand.u32 %v274, 4294901760
        %v580 = vsub.f32 %v274, %v579
        %v581 = vand.u32 %v580, 4294901760
        %v582 = vsub.f32 %v580, %v581
        %v583 = vand.u32 %v582, 4294901760
        %584 = vmatpush1.msra.mxu0 %v583
        %585 = vmatprep.subr.mxu0 0.0
        %v586 = vand.u32 %v275, 4294901760
        %v587 = vsub.f32 %v275, %v586
        %v588 = vand.u32 %v587, 4294901760
        %v589 = vsub.f32 %v587, %v588
        %v590 = vand.u32 %v589, 4294901760
        %591 = vmatpush1.msra.mxu0 %v590
        %592 = vmatprep.subr.mxu0 0.0
        %v593 = vand.u32 %v276, 4294901760
        %v594 = vsub.f32 %v276, %v593
        %v595 = vand.u32 %v594, 4294901760
        %v596 = vsub.f32 %v594, %v595
        %v597 = vand.u32 %v596, 4294901760
        %598 = vmatpush1.msra.mxu0 %v597
        %599 = vmatprep.subr.mxu0 0.0
        %v600 = vand.u32 %v277, 4294901760
        %v601 = vsub.f32 %v277, %v600
        %v602 = vand.u32 %v601, 4294901760
        %v603 = vsub.f32 %v601, %v602
        %v604 = vand.u32 %v603, 4294901760
        %605 = vmatpush1.msra.mxu0 %v604
        %606 = vmatprep.subr.mxu0 0.0
        %v607 = vand.u32 %v278, 4294901760
        %v608 = vsub.f32 %v278, %v607
        %v609 = vand.u32 %v608, 4294901760
        %v610 = vsub.f32 %v608, %v609
        %v611 = vand.u32 %v610, 4294901760
        %612 = vmatpush1.msra.mxu0 %v611
        %613 = vmatprep.subr.mxu0 0.0
        %v614 = vand.u32 %v279, 4294901760
        %v615 = vsub.f32 %v279, %v614
        %v616 = vand.u32 %v615, 4294901760
        %v617 = vsub.f32 %v615, %v616
        %v618 = vand.u32 %v617, 4294901760
        %619 = vmatpush1.msra.mxu0 %v618
        %620 = vmatprep.subr.mxu0 0.0
        %v621 = vand.u32 %v280, 4294901760
        %v622 = vsub.f32 %v280, %v621
        %v623 = vand.u32 %v622, 4294901760
        %v624 = vsub.f32 %v622, %v623
        %v625 = vand.u32 %v624, 4294901760
        %626 = vmatpush1.msra.mxu0 %v625
        %627 = vmatprep.subr.mxu0 0.0
        %v628 = vand.u32 %v281, 4294901760
        %v629 = vsub.f32 %v281, %v628
        %v630 = vand.u32 %v629, 4294901760
        %v631 = vsub.f32 %v629, %v630
        %v632 = vand.u32 %v631, 4294901760
        %633 = vmatpush1.msra.mxu0 %v632
        %634 = vmatprep.subr.mxu0 0.0
        %v635 = vand.u32 %v282, 4294901760
        %v636 = vsub.f32 %v282, %v635
        %v637 = vand.u32 %v636, 4294901760
        %v638 = vsub.f32 %v636, %v637
        %v639 = vand.u32 %v638, 4294901760
        %640 = vmatpush1.msra.mxu0 %v639
        %641 = vmatprep.subr.mxu0 0.0
        %v642 = vand.u32 %v283, 4294901760
        %v643 = vsub.f32 %v283, %v642
        %v644 = vand.u32 %v643, 4294901760
        %v645 = vsub.f32 %v643, %v644
        %v646 = vand.u32 %v645, 4294901760
        %647 = vmatpush1.msra.mxu0 %v646
        %648 = vmatprep.subr.mxu0 0.0
        %v649 = vand.u32 %v284, 4294901760
        %v650 = vsub.f32 %v284, %v649
        %v651 = vand.u32 %v650, 4294901760
        %v652 = vsub.f32 %v650, %v651
        %v653 = vand.u32 %v652, 4294901760
        %654 = vmatpush1.msra.mxu0 %v653
        %655 = vmatprep.subr.mxu0 0.0
        %v656 = vand.u32 %v285, 4294901760
        %v657 = vsub.f32 %v285, %v656
        %v658 = vand.u32 %v657, 4294901760
        %v659 = vsub.f32 %v657, %v658
        %v660 = vand.u32 %v659, 4294901760
        %661 = vmatpush1.msra.mxu0 %v660
        %662 = vmatprep.subr.mxu0 0.0
        %v663 = vand.u32 %v286, 4294901760
        %v664 = vsub.f32 %v286, %v663
        %v665 = vand.u32 %v664, 4294901760
        %v666 = vsub.f32 %v664, %v665
        %v667 = vand.u32 %v666, 4294901760
        %668 = vmatpush1.msra.mxu0 %v667
        %669 = vmatprep.subr.mxu0 0.0
        %v670 = vand.u32 %v287, 4294901760
        %v671 = vsub.f32 %v287, %v670
        %v672 = vand.u32 %v671, 4294901760
        %v673 = vsub.f32 %v671, %v672
        %v674 = vand.u32 %v673, 4294901760
        %675 = vmatpush1.msra.mxu0 %v674
        %676 = vmatprep.subr.mxu0 0.0
        %v677 = vand.u32 %v288, 4294901760
        %v678 = vsub.f32 %v288, %v677
        %v679 = vand.u32 %v678, 4294901760
        %v680 = vsub.f32 %v678, %v679
        %v681 = vand.u32 %v680, 4294901760
        %682 = vmatpush1.msra.mxu0 %v681
        %683 = vmatprep.subr.mxu0 0.0
        %v684 = vand.u32 %v289, 4294901760
        %v685 = vsub.f32 %v289, %v684
        %v686 = vand.u32 %v685, 4294901760
        %v687 = vsub.f32 %v685, %v686
        %v688 = vand.u32 %v687, 4294901760
        %689 = vmatpush1.msra.mxu0 %v688
        %690 = vmatprep.subr.mxu0 0.0
        %v691 = vand.u32 %v290, 4294901760
        %v692 = vsub.f32 %v290, %v691
        %v693 = vand.u32 %v692, 4294901760
        %v694 = vsub.f32 %v692, %v693
        %v695 = vand.u32 %v694, 4294901760
        %696 = vmatpush1.msra.mxu0 %v695
        %697 = vmatprep.subr.mxu0 0.0
        %v698 = vand.u32 %v291, 4294901760
        %v699 = vsub.f32 %v291, %v698
        %v700 = vand.u32 %v699, 4294901760
        %v701 = vsub.f32 %v699, %v700
        %v702 = vand.u32 %v701, 4294901760
        %703 = vmatpush1.msra.mxu0 %v702
        %704 = vmatprep.subr.mxu0 0.0
        %v705 = vand.u32 %v292, 4294901760
        %v706 = vsub.f32 %v292, %v705
        %v707 = vand.u32 %v706, 4294901760
        %v708 = vsub.f32 %v706, %v707
        %v709 = vand.u32 %v708, 4294901760
        %710 = vmatpush1.msra.mxu0 %v709
        %711 = vmatprep.subr.mxu0 0.0
        %v712 = vand.u32 %v293, 4294901760
        %v713 = vsub.f32 %v293, %v712
        %v714 = vand.u32 %v713, 4294901760
        %v715 = vsub.f32 %v713, %v714
        %v716 = vand.u32 %v715, 4294901760
        %717 = vmatpush1.msra.mxu0 %v716
        %718 = vmatprep.subr.mxu0 0.0
        %v719 = vand.u32 %v294, 4294901760
        %v720 = vsub.f32 %v294, %v719
        %v721 = vand.u32 %v720, 4294901760
        %v722 = vsub.f32 %v720, %v721
        %v723 = vand.u32 %v722, 4294901760
        %724 = vmatpush1.msra.mxu0 %v723
        %725 = vmatprep.subr.mxu0 0.0
        %v726 = vand.u32 %v295, 4294901760
        %v727 = vsub.f32 %v295, %v726
        %v728 = vand.u32 %v727, 4294901760
        %v729 = vsub.f32 %v727, %v728
        %v730 = vand.u32 %v729, 4294901760
        %731 = vmatpush1.msra.mxu0 %v730
        %732 = vmatprep.subr.mxu0 0.0
        %v733 = vand.u32 %v296, 4294901760
        %v734 = vsub.f32 %v296, %v733
        %v735 = vand.u32 %v734, 4294901760
        %v736 = vsub.f32 %v734, %v735
        %v737 = vand.u32 %v736, 4294901760
        %738 = vmatpush1.msra.mxu0 %v737
        %739 = vmatprep.subr.mxu0 0.0
        %v740 = vand.u32 %v297, 4294901760
        %v741 = vsub.f32 %v297, %v740
        %v742 = vand.u32 %v741, 4294901760
        %v743 = vsub.f32 %v741, %v742
        %v744 = vand.u32 %v743, 4294901760
        %745 = vmatpush1.msra.mxu0 %v744
        %v746 = vand.u32 %v163, 4294901760
        %747 = vmatprep.mubr.f32.mxu0 %v746
        %v748 = vand.u32 %v162, 4294901760
        %749 = vmatmul.mubr.f32.gmra.mrb[0].mxu0 %v748
        %v750 = vpop.f32.mrb[0].mxu0
        %v751 = vadd.f32 %v504, %v750
        %v752 = vpop.f32.mrb[0].mxu0
        %v753 = vand.u32 %v165, 4294901760
        %754 = vmatprep.mubr.f32.mxu0 %v753
        %v755 = vand.u32 %v164, 4294901760
        %756 = vmatmul.mubr.f32.gmra.mrb[0].mxu0 %v755
        %v757 = vpop.f32.mrb[0].mxu0
        %v758 = vadd.f32 %v519, %v757
        %v759 = vpop.f32.mrb[0].mxu0
        %760 = vdwg.mxu0
        %761 = vmatprep.subr.mxu0 0.0
        %v762 = vand.u32 %v266, 4294901760
        %v763 = vsub.f32 %v266, %v762
        %764 = vmatpush1.msra.mxu0 %v763
        %765 = vmatprep.subr.mxu0 0.0
        %v766 = vand.u32 %v267, 4294901760
        %v767 = vsub.f32 %v267, %v766
        %768 = vmatpush1.msra.mxu0 %v767
        %769 = vmatprep.subr.mxu0 0.0
        %v770 = vand.u32 %v268, 4294901760
        %v771 = vsub.f32 %v268, %v770
        %772 = vmatpush1.msra.mxu0 %v771
        %773 = vmatprep.subr.mxu0 0.0
        %v774 = vand.u32 %v269, 4294901760
        %v775 = vsub.f32 %v269, %v774
        %776 = vmatpush1.msra.mxu0 %v775
        %777 = vmatprep.subr.mxu0 0.0
        %v778 = vand.u32 %v270, 4294901760
        %v779 = vsub.f32 %v270, %v778
        %780 = vmatpush1.msra.mxu0 %v779
        %781 = vmatprep.subr.mxu0 0.0
        %v782 = vand.u32 %v271, 4294901760
        %v783 = vsub.f32 %v271, %v782
        %784 = vmatpush1.msra.mxu0 %v783
        %785 = vmatprep.subr.mxu0 0.0
        %v786 = vand.u32 %v272, 4294901760
        %v787 = vsub.f32 %v272, %v786
        %788 = vmatpush1.msra.mxu0 %v787
        %789 = vmatprep.subr.mxu0 0.0
        %v790 = vand.u32 %v273, 4294901760
        %v791 = vsub.f32 %v273, %v790
        %792 = vmatpush1.msra.mxu0 %v791
        %793 = vmatprep.subr.mxu0 0.0
        %v794 = vand.u32 %v274, 4294901760
        %v795 = vsub.f32 %v274, %v794
        %796 = vmatpush1.msra.mxu0 %v795
        %797 = vmatprep.subr.mxu0 0.0
        %v798 = vand.u32 %v275, 4294901760
        %v799 = vsub.f32 %v275, %v798
        %800 = vmatpush1.msra.mxu0 %v799
        %801 = vmatprep.subr.mxu0 0.0
        %v802 = vand.u32 %v276, 4294901760
        %v803 = vsub.f32 %v276, %v802
        %804 = vmatpush1.msra.mxu0 %v803
        %805 = vmatprep.subr.mxu0 0.0
        %v806 = vand.u32 %v277, 4294901760
        %v807 = vsub.f32 %v277, %v806
        %808 = vmatpush1.msra.mxu0 %v807
        %809 = vmatprep.subr.mxu0 0.0
        %v810 = vand.u32 %v278, 4294901760
        %v811 = vsub.f32 %v278, %v810
        %812 = vmatpush1.msra.mxu0 %v811
        %813 = vmatprep.subr.mxu0 0.0
        %v814 = vand.u32 %v279, 4294901760
        %v815 = vsub.f32 %v279, %v814
        %816 = vmatpush1.msra.mxu0 %v815
        %817 = vmatprep.subr.mxu0 0.0
        %v818 = vand.u32 %v280, 4294901760
        %v819 = vsub.f32 %v280, %v818
        %820 = vmatpush1.msra.mxu0 %v819
        %821 = vmatprep.subr.mxu0 0.0
        %v822 = vand.u32 %v281, 4294901760
        %v823 = vsub.f32 %v281, %v822
        %824 = vmatpush1.msra.mxu0 %v823
        %825 = vmatprep.subr.mxu0 0.0
        %v826 = vand.u32 %v282, 4294901760
        %v827 = vsub.f32 %v282, %v826
        %828 = vmatpush1.msra.mxu0 %v827
        %829 = vmatprep.subr.mxu0 0.0
        %v830 = vand.u32 %v283, 4294901760
        %v831 = vsub.f32 %v283, %v830
        %832 = vmatpush1.msra.mxu0 %v831
        %833 = vmatprep.subr.mxu0 0.0
        %v834 = vand.u32 %v284, 4294901760
        %v835 = vsub.f32 %v284, %v834
        %836 = vmatpush1.msra.mxu0 %v835
        %837 = vmatprep.subr.mxu0 0.0
        %v838 = vand.u32 %v285, 4294901760
        %v839 = vsub.f32 %v285, %v838
        %840 = vmatpush1.msra.mxu0 %v839
        %841 = vmatprep.subr.mxu0 0.0
        %v842 = vand.u32 %v286, 4294901760
        %v843 = vsub.f32 %v286, %v842
        %844 = vmatpush1.msra.mxu0 %v843
        %845 = vmatprep.subr.mxu0 0.0
        %v846 = vand.u32 %v287, 4294901760
        %v847 = vsub.f32 %v287, %v846
        %848 = vmatpush1.msra.mxu0 %v847
        %849 = vmatprep.subr.mxu0 0.0
        %v850 = vand.u32 %v288, 4294901760
        %v851 = vsub.f32 %v288, %v850
        %852 = vmatpush1.msra.mxu0 %v851
        %853 = vmatprep.subr.mxu0 0.0
        %v854 = vand.u32 %v289, 4294901760
        %v855 = vsub.f32 %v289, %v854
        %856 = vmatpush1.msra.mxu0 %v855
        %857 = vmatprep.subr.mxu0 0.0
        %v858 = vand.u32 %v290, 4294901760
        %v859 = vsub.f32 %v290, %v858
        %860 = vmatpush1.msra.mxu0 %v859
        %861 = vmatprep.subr.mxu0 0.0
        %v862 = vand.u32 %v291, 4294901760
        %v863 = vsub.f32 %v291, %v862
        %864 = vmatpush1.msra.mxu0 %v863
        %865 = vmatprep.subr.mxu0 0.0
        %v866 = vand.u32 %v292, 4294901760
        %v867 = vsub.f32 %v292, %v866
        %868 = vmatpush1.msra.mxu0 %v867
        %869 = vmatprep.subr.mxu0 0.0
        %v870 = vand.u32 %v293, 4294901760
        %v871 = vsub.f32 %v293, %v870
        %872 = vmatpush1.msra.mxu0 %v871
        %873 = vmatprep.subr.mxu0 0.0
        %v874 = vand.u32 %v294, 4294901760
        %v875 = vsub.f32 %v294, %v874
        %876 = vmatpush1.msra.mxu0 %v875
        %877 = vmatprep.subr.mxu0 0.0
        %v878 = vand.u32 %v295, 4294901760
        %v879 = vsub.f32 %v295, %v878
        %880 = vmatpush1.msra.mxu0 %v879
        %881 = vmatprep.subr.mxu0 0.0
        %v882 = vand.u32 %v296, 4294901760
        %v883 = vsub.f32 %v296, %v882
        %884 = vmatpush1.msra.mxu0 %v883
        %885 = vmatprep.subr.mxu0 0.0
        %v886 = vand.u32 %v297, 4294901760
        %v887 = vsub.f32 %v297, %v886
        %888 = vmatpush1.msra.mxu0 %v887
        %v889 = vand.u32 %v163, 4294901760
        %v890 = vsub.f32 %v163, %v889
        %891 = vmatprep.mubr.f32.mxu0 %v890
        %v892 = vand.u32 %v162, 4294901760
        %v893 = vsub.f32 %v162, %v892
        %894 = vmatmul.mubr.f32.gmra.mrb[0].mxu0 %v893
        %v895 = vpop.f32.mrb[0].mxu0
        %v896 = vadd.f32 %v751, %v895
        %v897 = vpop.f32.mrb[0].mxu0
        %v898 = vand.u32 %v165, 4294901760
        %v899 = vsub.f32 %v165, %v898
        %900 = vmatprep.mubr.f32.mxu0 %v899
        %v901 = vand.u32 %v164, 4294901760
        %v902 = vsub.f32 %v164, %v901
        %903 = vmatmul.mubr.f32.gmra.mrb[0].mxu0 %v902
        %v904 = vpop.f32.mrb[0].mxu0
        %v905 = vadd.f32 %v758, %v904
        %v906 = vpop.f32.mrb[0].mxu0
        %907 = vdwg.mxu0
        %908 = vmatprep.subr.mxu0 0.0
        %v909 = vand.u32 %v266, 4294901760
        %910 = vmatpush1.msra.mxu0 %v909
        %911 = vmatprep.subr.mxu0 0.0
        %v912 = vand.u32 %v267, 4294901760
        %913 = vmatpush1.msra.mxu0 %v912
        %914 = vmatprep.subr.mxu0 0.0
        %v915 = vand.u32 %v268, 4294901760
        %916 = vmatpush1.msra.mxu0 %v915
        %917 = vmatprep.subr.mxu0 0.0
        %v918 = vand.u32 %v269, 4294901760
        %919 = vmatpush1.msra.mxu0 %v918
        %920 = vmatprep.subr.mxu0 0.0
        %v921 = vand.u32 %v270, 4294901760
        %922 = vmatpush1.msra.mxu0 %v921
        %923 = vmatprep.subr.mxu0 0.0
        %v924 = vand.u32 %v271, 4294901760
        %925 = vmatpush1.msra.mxu0 %v924
        %926 = vmatprep.subr.mxu0 0.0
        %v927 = vand.u32 %v272, 4294901760
        %928 = vmatpush1.msra.mxu0 %v927
        %929 = vmatprep.subr.mxu0 0.0
        %v930 = vand.u32 %v273, 4294901760
        %931 = vmatpush1.msra.mxu0 %v930
        %932 = vmatprep.subr.mxu0 0.0
        %v933 = vand.u32 %v274, 4294901760
        %934 = vmatpush1.msra.mxu0 %v933
        %935 = vmatprep.subr.mxu0 0.0
        %v936 = vand.u32 %v275, 4294901760
        %937 = vmatpush1.msra.mxu0 %v936
        %938 = vmatprep.subr.mxu0 0.0
        %v939 = vand.u32 %v276, 4294901760
        %940 = vmatpush1.msra.mxu0 %v939
        %941 = vmatprep.subr.mxu0 0.0
        %v942 = vand.u32 %v277, 4294901760
        %943 = vmatpush1.msra.mxu0 %v942
        %944 = vmatprep.subr.mxu0 0.0
        %v945 = vand.u32 %v278, 4294901760
        %946 = vmatpush1.msra.mxu0 %v945
        %947 = vmatprep.subr.mxu0 0.0
        %v948 = vand.u32 %v279, 4294901760
        %949 = vmatpush1.msra.mxu0 %v948
        %950 = vmatprep.subr.mxu0 0.0
        %v951 = vand.u32 %v280, 4294901760
        %952 = vmatpush1.msra.mxu0 %v951
        %953 = vmatprep.subr.mxu0 0.0
        %v954 = vand.u32 %v281, 4294901760
        %955 = vmatpush1.msra.mxu0 %v954
        %956 = vmatprep.subr.mxu0 0.0
        %v957 = vand.u32 %v282, 4294901760
        %958 = vmatpush1.msra.mxu0 %v957
        %959 = vmatprep.subr.mxu0 0.0
        %v960 = vand.u32 %v283, 4294901760
        %961 = vmatpush1.msra.mxu0 %v960
        %962 = vmatprep.subr.mxu0 0.0
        %v963 = vand.u32 %v284, 4294901760
        %964 = vmatpush1.msra.mxu0 %v963
        %965 = vmatprep.subr.mxu0 0.0
        %v966 = vand.u32 %v285, 4294901760
        %967 = vmatpush1.msra.mxu0 %v966
        %968 = vmatprep.subr.mxu0 0.0
        %v969 = vand.u32 %v286, 4294901760
        %970 = vmatpush1.msra.mxu0 %v969
        %971 = vmatprep.subr.mxu0 0.0
        %v972 = vand.u32 %v287, 4294901760
        %973 = vmatpush1.msra.mxu0 %v972
        %974 = vmatprep.subr.mxu0 0.0
        %v975 = vand.u32 %v288, 4294901760
        %976 = vmatpush1.msra.mxu0 %v975
        %977 = vmatprep.subr.mxu0 0.0
        %v978 = vand.u32 %v289, 4294901760
        %979 = vmatpush1.msra.mxu0 %v978
        %980 = vmatprep.subr.mxu0 0.0
        %v981 = vand.u32 %v290, 4294901760
        %982 = vmatpush1.msra.mxu0 %v981
        %983 = vmatprep.subr.mxu0 0.0
        %v984 = vand.u32 %v291, 4294901760
        %985 = vmatpush1.msra.mxu0 %v984
        %986 = vmatprep.subr.mxu0 0.0
        %v987 = vand.u32 %v292, 4294901760
        %988 = vmatpush1.msra.mxu0 %v987
        %989 = vmatprep.subr.mxu0 0.0
        %v990 = vand.u32 %v293, 4294901760
        %991 = vmatpush1.msra.mxu0 %v990
        %992 = vmatprep.subr.mxu0 0.0
        %v993 = vand.u32 %v294, 4294901760
        %994 = vmatpush1.msra.mxu0 %v993
        %995 = vmatprep.subr.mxu0 0.0
        %v996 = vand.u32 %v295, 4294901760
        %997 = vmatpush1.msra.mxu0 %v996
        %998 = vmatprep.subr.mxu0 0.0
        %v999 = vand.u32 %v296, 4294901760
        %1000 = vmatpush1.msra.mxu0 %v999
        %1001 = vmatprep.subr.mxu0 0.0
        %v1002 = vand.u32 %v297, 4294901760
        %1003 = vmatpush1.msra.mxu0 %v1002
        %v1004 = vand.u32 %v163, 4294901760
        %v1005 = vsub.f32 %v163, %v1004
        %v1006 = vand.u32 %v1005, 4294901760
        %1007 = vmatprep.mubr.f32.mxu0 %v1006
        %v1008 = vand.u32 %v162, 4294901760
        %v1009 = vsub.f32 %v162, %v1008
        %v1010 = vand.u32 %v1009, 4294901760
        %1011 = vmatmul.mubr.f32.gmra.mrb[0].mxu0 %v1010
        %v1012 = vpop.f32.mrb[0].mxu0
        %v1013 = vadd.f32 %v896, %v1012
        %v1014 = vpop.f32.mrb[0].mxu0
        %v1015 = vand.u32 %v165, 4294901760
        %v1016 = vsub.f32 %v165, %v1015
        %v1017 = vand.u32 %v1016, 4294901760
        %1018 = vmatprep.mubr.f32.mxu0 %v1017
        %v1019 = vand.u32 %v164, 4294901760
        %v1020 = vsub.f32 %v164, %v1019
        %v1021 = vand.u32 %v1020, 4294901760
        %1022 = vmatmul.mubr.f32.gmra.mrb[0].mxu0 %v1021
        %v1023 = vpop.f32.mrb[0].mxu0
        %v1024 = vadd.f32 %v905, %v1023
        %v1025 = vpop.f32.mrb[0].mxu0
        %1026 = vdwg.mxu0
        %1027 = vmatprep.subr.mxu0 0.0
        %v1028 = vand.u32 %v266, 4294901760
        %v1029 = vsub.f32 %v266, %v1028
        %v1030 = vand.u32 %v1029, 4294901760
        %1031 = vmatpush1.msra.mxu0 %v1030
        %1032 = vmatprep.subr.mxu0 0.0
        %v1033 = vand.u32 %v267, 4294901760
        %v1034 = vsub.f32 %v267, %v1033
        %v1035 = vand.u32 %v1034, 4294901760
        %1036 = vmatpush1.msra.mxu0 %v1035
        %1037 = vmatprep.subr.mxu0 0.0
        %v1038 = vand.u32 %v268, 4294901760
        %v1039 = vsub.f32 %v268, %v1038
        %v1040 = vand.u32 %v1039, 4294901760
        %1041 = vmatpush1.msra.mxu0 %v1040
        %1042 = vmatprep.subr.mxu0 0.0
        %v1043 = vand.u32 %v269, 4294901760
        %v1044 = vsub.f32 %v269, %v1043
        %v1045 = vand.u32 %v1044, 4294901760
        %1046 = vmatpush1.msra.mxu0 %v1045
        %1047 = vmatprep.subr.mxu0 0.0
        %v1048 = vand.u32 %v270, 4294901760
        %v1049 = vsub.f32 %v270, %v1048
        %v1050 = vand.u32 %v1049, 4294901760
        %1051 = vmatpush1.msra.mxu0 %v1050
        %1052 = vmatprep.subr.mxu0 0.0
        %v1053 = vand.u32 %v271, 4294901760
        %v1054 = vsub.f32 %v271, %v1053
        %v1055 = vand.u32 %v1054, 4294901760
        %1056 = vmatpush1.msra.mxu0 %v1055
        %1057 = vmatprep.subr.mxu0 0.0
        %v1058 = vand.u32 %v272, 4294901760
        %v1059 = vsub.f32 %v272, %v1058
        %v1060 = vand.u32 %v1059, 4294901760
        %1061 = vmatpush1.msra.mxu0 %v1060
        %1062 = vmatprep.subr.mxu0 0.0
        %v1063 = vand.u32 %v273, 4294901760
        %v1064 = vsub.f32 %v273, %v1063
        %v1065 = vand.u32 %v1064, 4294901760
        %1066 = vmatpush1.msra.mxu0 %v1065
        %1067 = vmatprep.subr.mxu0 0.0
        %v1068 = vand.u32 %v274, 4294901760
        %v1069 = vsub.f32 %v274, %v1068
        %v1070 = vand.u32 %v1069, 4294901760
        %1071 = vmatpush1.msra.mxu0 %v1070
        %1072 = vmatprep.subr.mxu0 0.0
        %v1073 = vand.u32 %v275, 4294901760
        %v1074 = vsub.f32 %v275, %v1073
        %v1075 = vand.u32 %v1074, 4294901760
        %1076 = vmatpush1.msra.mxu0 %v1075
        %1077 = vmatprep.subr.mxu0 0.0
        %v1078 = vand.u32 %v276, 4294901760
        %v1079 = vsub.f32 %v276, %v1078
        %v1080 = vand.u32 %v1079, 4294901760
        %1081 = vmatpush1.msra.mxu0 %v1080
        %1082 = vmatprep.subr.mxu0 0.0
        %v1083 = vand.u32 %v277, 4294901760
        %v1084 = vsub.f32 %v277, %v1083
        %v1085 = vand.u32 %v1084, 4294901760
        %1086 = vmatpush1.msra.mxu0 %v1085
        %1087 = vmatprep.subr.mxu0 0.0
        %v1088 = vand.u32 %v278, 4294901760
        %v1089 = vsub.f32 %v278, %v1088
        %v1090 = vand.u32 %v1089, 4294901760
        %1091 = vmatpush1.msra.mxu0 %v1090
        %1092 = vmatprep.subr.mxu0 0.0
        %v1093 = vand.u32 %v279, 4294901760
        %v1094 = vsub.f32 %v279, %v1093
        %v1095 = vand.u32 %v1094, 4294901760
        %1096 = vmatpush1.msra.mxu0 %v1095
        %1097 = vmatprep.subr.mxu0 0.0
        %v1098 = vand.u32 %v280, 4294901760
        %v1099 = vsub.f32 %v280, %v1098
        %v1100 = vand.u32 %v1099, 4294901760
        %1101 = vmatpush1.msra.mxu0 %v1100
        %1102 = vmatprep.subr.mxu0 0.0
        %v1103 = vand.u32 %v281, 4294901760
        %v1104 = vsub.f32 %v281, %v1103
        %v1105 = vand.u32 %v1104, 4294901760
        %1106 = vmatpush1.msra.mxu0 %v1105
        %1107 = vmatprep.subr.mxu0 0.0
        %v1108 = vand.u32 %v282, 4294901760
        %v1109 = vsub.f32 %v282, %v1108
        %v1110 = vand.u32 %v1109, 4294901760
        %1111 = vmatpush1.msra.mxu0 %v1110
        %1112 = vmatprep.subr.mxu0 0.0
        %v1113 = vand.u32 %v283, 4294901760
        %v1114 = vsub.f32 %v283, %v1113
        %v1115 = vand.u32 %v1114, 4294901760
        %1116 = vmatpush1.msra.mxu0 %v1115
        %1117 = vmatprep.subr.mxu0 0.0
        %v1118 = vand.u32 %v284, 4294901760
        %v1119 = vsub.f32 %v284, %v1118
        %v1120 = vand.u32 %v1119, 4294901760
        %1121 = vmatpush1.msra.mxu0 %v1120
        %1122 = vmatprep.subr.mxu0 0.0
        %v1123 = vand.u32 %v285, 4294901760
        %v1124 = vsub.f32 %v285, %v1123
        %v1125 = vand.u32 %v1124, 4294901760
        %1126 = vmatpush1.msra.mxu0 %v1125
        %1127 = vmatprep.subr.mxu0 0.0
        %v1128 = vand.u32 %v286, 4294901760
        %v1129 = vsub.f32 %v286, %v1128
        %v1130 = vand.u32 %v1129, 4294901760
        %1131 = vmatpush1.msra.mxu0 %v1130
        %1132 = vmatprep.subr.mxu0 0.0
        %v1133 = vand.u32 %v287, 4294901760
        %v1134 = vsub.f32 %v287, %v1133
        %v1135 = vand.u32 %v1134, 4294901760
        %1136 = vmatpush1.msra.mxu0 %v1135
        %1137 = vmatprep.subr.mxu0 0.0
        %v1138 = vand.u32 %v288, 4294901760
        %v1139 = vsub.f32 %v288, %v1138
        %v1140 = vand.u32 %v1139, 4294901760
        %1141 = vmatpush1.msra.mxu0 %v1140
        %1142 = vmatprep.subr.mxu0 0.0
        %v1143 = vand.u32 %v289, 4294901760
        %v1144 = vsub.f32 %v289, %v1143
        %v1145 = vand.u32 %v1144, 4294901760
        %1146 = vmatpush1.msra.mxu0 %v1145
        %1147 = vmatprep.subr.mxu0 0.0
        %v1148 = vand.u32 %v290, 4294901760
        %v1149 = vsub.f32 %v290, %v1148
        %v1150 = vand.u32 %v1149, 4294901760
        %1151 = vmatpush1.msra.mxu0 %v1150
        %1152 = vmatprep.subr.mxu0 0.0
        %v1153 = vand.u32 %v291, 4294901760
        %v1154 = vsub.f32 %v291, %v1153
        %v1155 = vand.u32 %v1154, 4294901760
        %1156 = vmatpush1.msra.mxu0 %v1155
        %1157 = vmatprep.subr.mxu0 0.0
        %v1158 = vand.u32 %v292, 4294901760
        %v1159 = vsub.f32 %v292, %v1158
        %v1160 = vand.u32 %v1159, 4294901760
        %1161 = vmatpush1.msra.mxu0 %v1160
        %1162 = vmatprep.subr.mxu0 0.0
        %v1163 = vand.u32 %v293, 4294901760
        %v1164 = vsub.f32 %v293, %v1163
        %v1165 = vand.u32 %v1164, 4294901760
        %1166 = vmatpush1.msra.mxu0 %v1165
        %1167 = vmatprep.subr.mxu0 0.0
        %v1168 = vand.u32 %v294, 4294901760
        %v1169 = vsub.f32 %v294, %v1168
        %v1170 = vand.u32 %v1169, 4294901760
        %1171 = vmatpush1.msra.mxu0 %v1170
        %1172 = vmatprep.subr.mxu0 0.0
        %v1173 = vand.u32 %v295, 4294901760
        %v1174 = vsub.f32 %v295, %v1173
        %v1175 = vand.u32 %v1174, 4294901760
        %1176 = vmatpush1.msra.mxu0 %v1175
        %1177 = vmatprep.subr.mxu0 0.0
        %v1178 = vand.u32 %v296, 4294901760
        %v1179 = vsub.f32 %v296, %v1178
        %v1180 = vand.u32 %v1179, 4294901760
        %1181 = vmatpush1.msra.mxu0 %v1180
        %1182 = vmatprep.subr.mxu0 0.0
        %v1183 = vand.u32 %v297, 4294901760
        %v1184 = vsub.f32 %v297, %v1183
        %v1185 = vand.u32 %v1184, 4294901760
        %1186 = vmatpush1.msra.mxu0 %v1185
        %v1187 = vand.u32 %v163, 4294901760
        %1188 = vmatprep.mubr.f32.mxu0 %v1187
        %v1189 = vand.u32 %v162, 4294901760
        %1190 = vmatmul.mubr.f32.gmra.mrb[0].mxu0 %v1189
        %v1191 = vpop.f32.mrb[0].mxu0
        %v1192 = vadd.f32 %v1013, %v1191
        %v1193 = vpop.f32.mrb[0].mxu0
        %v1194 = vand.u32 %v165, 4294901760
        %1195 = vmatprep.mubr.f32.mxu0 %v1194
        %v1196 = vand.u32 %v164, 4294901760
        %1197 = vmatmul.mubr.f32.gmra.mrb[0].mxu0 %v1196
        %v1198 = vpop.f32.mrb[0].mxu0
        %v1199 = vadd.f32 %v1024, %v1198
        %v1200 = vpop.f32.mrb[0].mxu0
        %1201 = vdwg.mxu0
        %1202 = vmatprep.subr.mxu0 0.0
        %v1203 = vand.u32 %v266, 4294901760
        %1204 = vmatpush1.msra.mxu0 %v1203
        %1205 = vmatprep.subr.mxu0 0.0
        %v1206 = vand.u32 %v267, 4294901760
        %1207 = vmatpush1.msra.mxu0 %v1206
        %1208 = vmatprep.subr.mxu0 0.0
        %v1209 = vand.u32 %v268, 4294901760
        %1210 = vmatpush1.msra.mxu0 %v1209
        %1211 = vmatprep.subr.mxu0 0.0
        %v1212 = vand.u32 %v269, 4294901760
        %1213 = vmatpush1.msra.mxu0 %v1212
        %1214 = vmatprep.subr.mxu0 0.0
        %v1215 = vand.u32 %v270, 4294901760
        %1216 = vmatpush1.msra.mxu0 %v1215
        %1217 = vmatprep.subr.mxu0 0.0
        %v1218 = vand.u32 %v271, 4294901760
        %1219 = vmatpush1.msra.mxu0 %v1218
        %1220 = vmatprep.subr.mxu0 0.0
        %v1221 = vand.u32 %v272, 4294901760
        %1222 = vmatpush1.msra.mxu0 %v1221
        %1223 = vmatprep.subr.mxu0 0.0
        %v1224 = vand.u32 %v273, 4294901760
        %1225 = vmatpush1.msra.mxu0 %v1224
        %1226 = vmatprep.subr.mxu0 0.0
        %v1227 = vand.u32 %v274, 4294901760
        %1228 = vmatpush1.msra.mxu0 %v1227
        %1229 = vmatprep.subr.mxu0 0.0
        %v1230 = vand.u32 %v275, 4294901760
        %1231 = vmatpush1.msra.mxu0 %v1230
        %1232 = vmatprep.subr.mxu0 0.0
        %v1233 = vand.u32 %v276, 4294901760
        %1234 = vmatpush1.msra.mxu0 %v1233
        %1235 = vmatprep.subr.mxu0 0.0
        %v1236 = vand.u32 %v277, 4294901760
        %1237 = vmatpush1.msra.mxu0 %v1236
        %1238 = vmatprep.subr.mxu0 0.0
        %v1239 = vand.u32 %v278, 4294901760
        %1240 = vmatpush1.msra.mxu0 %v1239
        %1241 = vmatprep.subr.mxu0 0.0
        %v1242 = vand.u32 %v279, 4294901760
        %1243 = vmatpush1.msra.mxu0 %v1242
        %1244 = vmatprep.subr.mxu0 0.0
        %v1245 = vand.u32 %v280, 4294901760
        %1246 = vmatpush1.msra.mxu0 %v1245
        %1247 = vmatprep.subr.mxu0 0.0
        %v1248 = vand.u32 %v281, 4294901760
        %1249 = vmatpush1.msra.mxu0 %v1248
        %1250 = vmatprep.subr.mxu0 0.0
        %v1251 = vand.u32 %v282, 4294901760
        %1252 = vmatpush1.msra.mxu0 %v1251
        %1253 = vmatprep.subr.mxu0 0.0
        %v1254 = vand.u32 %v283, 4294901760
        %1255 = vmatpush1.msra.mxu0 %v1254
        %1256 = vmatprep.subr.mxu0 0.0
        %v1257 = vand.u32 %v284, 4294901760
        %1258 = vmatpush1.msra.mxu0 %v1257
        %1259 = vmatprep.subr.mxu0 0.0
        %v1260 = vand.u32 %v285, 4294901760
        %1261 = vmatpush1.msra.mxu0 %v1260
        %1262 = vmatprep.subr.mxu0 0.0
        %v1263 = vand.u32 %v286, 4294901760
        %1264 = vmatpush1.msra.mxu0 %v1263
        %1265 = vmatprep.subr.mxu0 0.0
        %v1266 = vand.u32 %v287, 4294901760
        %1267 = vmatpush1.msra.mxu0 %v1266
        %1268 = vmatprep.subr.mxu0 0.0
        %v1269 = vand.u32 %v288, 4294901760
        %1270 = vmatpush1.msra.mxu0 %v1269
        %1271 = vmatprep.subr.mxu0 0.0
        %v1272 = vand.u32 %v289, 4294901760
        %1273 = vmatpush1.msra.mxu0 %v1272
        %1274 = vmatprep.subr.mxu0 0.0
        %v1275 = vand.u32 %v290, 4294901760
        %1276 = vmatpush1.msra.mxu0 %v1275
        %1277 = vmatprep.subr.mxu0 0.0
        %v1278 = vand.u32 %v291, 4294901760
        %1279 = vmatpush1.msra.mxu0 %v1278
        %1280 = vmatprep.subr.mxu0 0.0
        %v1281 = vand.u32 %v292, 4294901760
        %1282 = vmatpush1.msra.mxu0 %v1281
        %1283 = vmatprep.subr.mxu0 0.0
        %v1284 = vand.u32 %v293, 4294901760
        %1285 = vmatpush1.msra.mxu0 %v1284
        %1286 = vmatprep.subr.mxu0 0.0
        %v1287 = vand.u32 %v294, 4294901760
        %1288 = vmatpush1.msra.mxu0 %v1287
        %1289 = vmatprep.subr.mxu0 0.0
        %v1290 = vand.u32 %v295, 4294901760
        %1291 = vmatpush1.msra.mxu0 %v1290
        %1292 = vmatprep.subr.mxu0 0.0
        %v1293 = vand.u32 %v296, 4294901760
        %1294 = vmatpush1.msra.mxu0 %v1293
        %1295 = vmatprep.subr.mxu0 0.0
        %v1296 = vand.u32 %v297, 4294901760
        %1297 = vmatpush1.msra.mxu0 %v1296
        %v1298 = vand.u32 %v163, 4294901760
        %1299 = vmatprep.mubr.f32.mxu0 %v1298
        %v1300 = vand.u32 %v162, 4294901760
        %1301 = vmatmul.mubr.f32.gmra.mrb[0].mxu0 %v1300
        %v1302 = vpop.f32.mrb[0].mxu0
        %v1303 = vadd.f32 %v1192, %v1302
        %v1304 = vpop.f32.mrb[0].mxu0
        %v1305 = vand.u32 %v165, 4294901760
        %1306 = vmatprep.mubr.f32.mxu0 %v1305
        %v1307 = vand.u32 %v164, 4294901760
        %1308 = vmatmul.mubr.f32.gmra.mrb[0].mxu0 %v1307
        %v1309 = vpop.f32.mrb[0].mxu0
        %v1310 = vadd.f32 %v1199, %v1309
        %v1311 = vpop.f32.mrb[0].mxu0
        %1312 = vdwg.mxu0
        %1313 = vmatprep.subr.mxu0 0.0
        %v1314 = vand.u32 %v363, 4294901760
        %1315 = vmatpush1.msra.mxu0 %v1314
        %1316 = vmatprep.subr.mxu0 0.0
        %v1317 = vand.u32 %v364, 4294901760
        %1318 = vmatpush1.msra.mxu0 %v1317
        %1319 = vmatprep.subr.mxu0 0.0
        %v1320 = vand.u32 %v365, 4294901760
        %1321 = vmatpush1.msra.mxu0 %v1320
        %1322 = vmatprep.subr.mxu0 0.0
        %v1323 = vand.u32 %v366, 4294901760
        %1324 = vmatpush1.msra.mxu0 %v1323
        %1325 = vmatprep.subr.mxu0 0.0
        %v1326 = vand.u32 %v367, 4294901760
        %1327 = vmatpush1.msra.mxu0 %v1326
        %1328 = vmatprep.subr.mxu0 0.0
        %v1329 = vand.u32 %v368, 4294901760
        %1330 = vmatpush1.msra.mxu0 %v1329
        %1331 = vmatprep.subr.mxu0 0.0
        %v1332 = vand.u32 %v369, 4294901760
        %1333 = vmatpush1.msra.mxu0 %v1332
        %1334 = vmatprep.subr.mxu0 0.0
        %v1335 = vand.u32 %v370, 4294901760
        %1336 = vmatpush1.msra.mxu0 %v1335
        %1337 = vmatprep.subr.mxu0 0.0
        %v1338 = vand.u32 %v371, 4294901760
        %1339 = vmatpush1.msra.mxu0 %v1338
        %1340 = vmatprep.subr.mxu0 0.0
        %v1341 = vand.u32 %v372, 4294901760
        %1342 = vmatpush1.msra.mxu0 %v1341
        %1343 = vmatprep.subr.mxu0 0.0
        %v1344 = vand.u32 %v373, 4294901760
        %1345 = vmatpush1.msra.mxu0 %v1344
        %1346 = vmatprep.subr.mxu0 0.0
        %v1347 = vand.u32 %v374, 4294901760
        %1348 = vmatpush1.msra.mxu0 %v1347
        %1349 = vmatprep.subr.mxu0 0.0
        %v1350 = vand.u32 %v375, 4294901760
        %1351 = vmatpush1.msra.mxu0 %v1350
        %1352 = vmatprep.subr.mxu0 0.0
        %v1353 = vand.u32 %v376, 4294901760
        %1354 = vmatpush1.msra.mxu0 %v1353
        %1355 = vmatprep.subr.mxu0 0.0
        %v1356 = vand.u32 %v377, 4294901760
        %1357 = vmatpush1.msra.mxu0 %v1356
        %1358 = vmatprep.subr.mxu0 0.0
        %v1359 = vand.u32 %v378, 4294901760
        %1360 = vmatpush1.msra.mxu0 %v1359
        %1361 = vmatprep.subr.mxu0 0.0
        %v1362 = vand.u32 %v379, 4294901760
        %1363 = vmatpush1.msra.mxu0 %v1362
        %1364 = vmatprep.subr.mxu0 0.0
        %v1365 = vand.u32 %v380, 4294901760
        %1366 = vmatpush1.msra.mxu0 %v1365
        %1367 = vmatprep.subr.mxu0 0.0
        %v1368 = vand.u32 %v381, 4294901760
        %1369 = vmatpush1.msra.mxu0 %v1368
        %1370 = vmatprep.subr.mxu0 0.0
        %v1371 = vand.u32 %v382, 4294901760
        %1372 = vmatpush1.msra.mxu0 %v1371
        %1373 = vmatprep.subr.mxu0 0.0
        %v1374 = vand.u32 %v383, 4294901760
        %1375 = vmatpush1.msra.mxu0 %v1374
        %1376 = vmatprep.subr.mxu0 0.0
        %v1377 = vand.u32 %v384, 4294901760
        %1378 = vmatpush1.msra.mxu0 %v1377
        %1379 = vmatprep.subr.mxu0 0.0
        %v1380 = vand.u32 %v385, 4294901760
        %1381 = vmatpush1.msra.mxu0 %v1380
        %1382 = vmatprep.subr.mxu0 0.0
        %v1383 = vand.u32 %v386, 4294901760
        %1384 = vmatpush1.msra.mxu0 %v1383
        %1385 = vmatprep.subr.mxu0 0.0
        %v1386 = vand.u32 %v387, 4294901760
        %1387 = vmatpush1.msra.mxu0 %v1386
        %1388 = vmatprep.subr.mxu0 0.0
        %v1389 = vand.u32 %v388, 4294901760
        %1390 = vmatpush1.msra.mxu0 %v1389
        %1391 = vmatprep.subr.mxu0 0.0
        %v1392 = vand.u32 %v389, 4294901760
        %1393 = vmatpush1.msra.mxu0 %v1392
        %1394 = vmatprep.subr.mxu0 0.0
        %v1395 = vand.u32 %v390, 4294901760
        %1396 = vmatpush1.msra.mxu0 %v1395
        %1397 = vmatprep.subr.mxu0 0.0
        %v1398 = vand.u32 %v391, 4294901760
        %1399 = vmatpush1.msra.mxu0 %v1398
        %1400 = vmatprep.subr.mxu0 0.0
        %v1401 = vand.u32 %v392, 4294901760
        %1402 = vmatpush1.msra.mxu0 %v1401
        %1403 = vmatprep.subr.mxu0 0.0
        %v1404 = vand.u32 %v393, 4294901760
        %1405 = vmatpush1.msra.mxu0 %v1404
        %1406 = vmatprep.subr.mxu0 0.0
        %v1407 = vand.u32 %v394, 4294901760
        %1408 = vmatpush1.msra.mxu0 %v1407
        %v1409 = vand.u32 %v163, 4294901760
        %v1410 = vsub.f32 %v163, %v1409
        %v1411 = vand.u32 %v1410, 4294901760
        %v1412 = vsub.f32 %v1410, %v1411
        %v1413 = vand.u32 %v1412, 4294901760
        %1414 = vmatprep.mubr.f32.mxu0 %v1413
        %v1415 = vand.u32 %v162, 4294901760
        %v1416 = vsub.f32 %v162, %v1415
        %v1417 = vand.u32 %v1416, 4294901760
        %v1418 = vsub.f32 %v1416, %v1417
        %v1419 = vand.u32 %v1418, 4294901760
        %1420 = vmatmul.mubr.f32.gmra.mrb[0].mxu0 %v1419
        %v1421 = vpop.f32.mrb[0].mxu0
        %v1422 = vadd.f32 0.0, %v1421
        %v1423 = vpop.f32.mrb[0].mxu0
        %v1424 = vand.u32 %v165, 4294901760
        %v1425 = vsub.f32 %v165, %v1424
        %v1426 = vand.u32 %v1425, 4294901760
        %v1427 = vsub.f32 %v1425, %v1426
        %v1428 = vand.u32 %v1427, 4294901760
        %1429 = vmatprep.mubr.f32.mxu0 %v1428
        %v1430 = vand.u32 %v164, 4294901760
        %v1431 = vsub.f32 %v164, %v1430
        %v1432 = vand.u32 %v1431, 4294901760
        %v1433 = vsub.f32 %v1431, %v1432
        %v1434 = vand.u32 %v1433, 4294901760
        %1435 = vmatmul.mubr.f32.gmra.mrb[0].mxu0 %v1434
        %v1436 = vpop.f32.mrb[0].mxu0
        %v1437 = vadd.f32 0.0, %v1436
        %v1438 = vpop.f32.mrb[0].mxu0
        %1439 = vdwg.mxu0
        %1440 = vmatprep.subr.mxu0 0.0
        %v1441 = vand.u32 %v363, 4294901760
        %v1442 = vsub.f32 %v363, %v1441
        %v1443 = vand.u32 %v1442, 4294901760
        %v1444 = vsub.f32 %v1442, %v1443
        %v1445 = vand.u32 %v1444, 4294901760
        %1446 = vmatpush1.msra.mxu0 %v1445
        %1447 = vmatprep.subr.mxu0 0.0
        %v1448 = vand.u32 %v364, 4294901760
        %v1449 = vsub.f32 %v364, %v1448
        %v1450 = vand.u32 %v1449, 4294901760
        %v1451 = vsub.f32 %v1449, %v1450
        %v1452 = vand.u32 %v1451, 4294901760
        %1453 = vmatpush1.msra.mxu0 %v1452
        %1454 = vmatprep.subr.mxu0 0.0
        %v1455 = vand.u32 %v365, 4294901760
        %v1456 = vsub.f32 %v365, %v1455
        %v1457 = vand.u32 %v1456, 4294901760
        %v1458 = vsub.f32 %v1456, %v1457
        %v1459 = vand.u32 %v1458, 4294901760
        %1460 = vmatpush1.msra.mxu0 %v1459
        %1461 = vmatprep.subr.mxu0 0.0
        %v1462 = vand.u32 %v366, 4294901760
        %v1463 = vsub.f32 %v366, %v1462
        %v1464 = vand.u32 %v1463, 4294901760
        %v1465 = vsub.f32 %v1463, %v1464
        %v1466 = vand.u32 %v1465, 4294901760
        %1467 = vmatpush1.msra.mxu0 %v1466
        %1468 = vmatprep.subr.mxu0 0.0
        %v1469 = vand.u32 %v367, 4294901760
        %v1470 = vsub.f32 %v367, %v1469
        %v1471 = vand.u32 %v1470, 4294901760
        %v1472 = vsub.f32 %v1470, %v1471
        %v1473 = vand.u32 %v1472, 4294901760
        %1474 = vmatpush1.msra.mxu0 %v1473
        %1475 = vmatprep.subr.mxu0 0.0
        %v1476 = vand.u32 %v368, 4294901760
        %v1477 = vsub.f32 %v368, %v1476
        %v1478 = vand.u32 %v1477, 4294901760
        %v1479 = vsub.f32 %v1477, %v1478
        %v1480 = vand.u32 %v1479, 4294901760
        %1481 = vmatpush1.msra.mxu0 %v1480
        %1482 = vmatprep.subr.mxu0 0.0
        %v1483 = vand.u32 %v369, 4294901760
        %v1484 = vsub.f32 %v369, %v1483
        %v1485 = vand.u32 %v1484, 4294901760
        %v1486 = vsub.f32 %v1484, %v1485
        %v1487 = vand.u32 %v1486, 4294901760
        %1488 = vmatpush1.msra.mxu0 %v1487
        %1489 = vmatprep.subr.mxu0 0.0
        %v1490 = vand.u32 %v370, 4294901760
        %v1491 = vsub.f32 %v370, %v1490
        %v1492 = vand.u32 %v1491, 4294901760
        %v1493 = vsub.f32 %v1491, %v1492
        %v1494 = vand.u32 %v1493, 4294901760
        %1495 = vmatpush1.msra.mxu0 %v1494
        %1496 = vmatprep.subr.mxu0 0.0
        %v1497 = vand.u32 %v371, 4294901760
        %v1498 = vsub.f32 %v371, %v1497
        %v1499 = vand.u32 %v1498, 4294901760
        %v1500 = vsub.f32 %v1498, %v1499
        %v1501 = vand.u32 %v1500, 4294901760
        %1502 = vmatpush1.msra.mxu0 %v1501
        %1503 = vmatprep.subr.mxu0 0.0
        %v1504 = vand.u32 %v372, 4294901760
        %v1505 = vsub.f32 %v372, %v1504
        %v1506 = vand.u32 %v1505, 4294901760
        %v1507 = vsub.f32 %v1505, %v1506
        %v1508 = vand.u32 %v1507, 4294901760
        %1509 = vmatpush1.msra.mxu0 %v1508
        %1510 = vmatprep.subr.mxu0 0.0
        %v1511 = vand.u32 %v373, 4294901760
        %v1512 = vsub.f32 %v373, %v1511
        %v1513 = vand.u32 %v1512, 4294901760
        %v1514 = vsub.f32 %v1512, %v1513
        %v1515 = vand.u32 %v1514, 4294901760
        %1516 = vmatpush1.msra.mxu0 %v1515
        %1517 = vmatprep.subr.mxu0 0.0
        %v1518 = vand.u32 %v374, 4294901760
        %v1519 = vsub.f32 %v374, %v1518
        %v1520 = vand.u32 %v1519, 4294901760
        %v1521 = vsub.f32 %v1519, %v1520
        %v1522 = vand.u32 %v1521, 4294901760
        %1523 = vmatpush1.msra.mxu0 %v1522
        %1524 = vmatprep.subr.mxu0 0.0
        %v1525 = vand.u32 %v375, 4294901760
        %v1526 = vsub.f32 %v375, %v1525
        %v1527 = vand.u32 %v1526, 4294901760
        %v1528 = vsub.f32 %v1526, %v1527
        %v1529 = vand.u32 %v1528, 4294901760
        %1530 = vmatpush1.msra.mxu0 %v1529
        %1531 = vmatprep.subr.mxu0 0.0
        %v1532 = vand.u32 %v376, 4294901760
        %v1533 = vsub.f32 %v376, %v1532
        %v1534 = vand.u32 %v1533, 4294901760
        %v1535 = vsub.f32 %v1533, %v1534
        %v1536 = vand.u32 %v1535, 4294901760
        %1537 = vmatpush1.msra.mxu0 %v1536
        %1538 = vmatprep.subr.mxu0 0.0
        %v1539 = vand.u32 %v377, 4294901760
        %v1540 = vsub.f32 %v377, %v1539
        %v1541 = vand.u32 %v1540, 4294901760
        %v1542 = vsub.f32 %v1540, %v1541
        %v1543 = vand.u32 %v1542, 4294901760
        %1544 = vmatpush1.msra.mxu0 %v1543
        %1545 = vmatprep.subr.mxu0 0.0
        %v1546 = vand.u32 %v378, 4294901760
        %v1547 = vsub.f32 %v378, %v1546
        %v1548 = vand.u32 %v1547, 4294901760
        %v1549 = vsub.f32 %v1547, %v1548
        %v1550 = vand.u32 %v1549, 4294901760
        %1551 = vmatpush1.msra.mxu0 %v1550
        %1552 = vmatprep.subr.mxu0 0.0
        %v1553 = vand.u32 %v379, 4294901760
        %v1554 = vsub.f32 %v379, %v1553
        %v1555 = vand.u32 %v1554, 4294901760
        %v1556 = vsub.f32 %v1554, %v1555
        %v1557 = vand.u32 %v1556, 4294901760
        %1558 = vmatpush1.msra.mxu0 %v1557
        %1559 = vmatprep.subr.mxu0 0.0
        %v1560 = vand.u32 %v380, 4294901760
        %v1561 = vsub.f32 %v380, %v1560
        %v1562 = vand.u32 %v1561, 4294901760
        %v1563 = vsub.f32 %v1561, %v1562
        %v1564 = vand.u32 %v1563, 4294901760
        %1565 = vmatpush1.msra.mxu0 %v1564
        %1566 = vmatprep.subr.mxu0 0.0
        %v1567 = vand.u32 %v381, 4294901760
        %v1568 = vsub.f32 %v381, %v1567
        %v1569 = vand.u32 %v1568, 4294901760
        %v1570 = vsub.f32 %v1568, %v1569
        %v1571 = vand.u32 %v1570, 4294901760
        %1572 = vmatpush1.msra.mxu0 %v1571
        %1573 = vmatprep.subr.mxu0 0.0
        %v1574 = vand.u32 %v382, 4294901760
        %v1575 = vsub.f32 %v382, %v1574
        %v1576 = vand.u32 %v1575, 4294901760
        %v1577 = vsub.f32 %v1575, %v1576
        %v1578 = vand.u32 %v1577, 4294901760
        %1579 = vmatpush1.msra.mxu0 %v1578
        %1580 = vmatprep.subr.mxu0 0.0
        %v1581 = vand.u32 %v383, 4294901760
        %v1582 = vsub.f32 %v383, %v1581
        %v1583 = vand.u32 %v1582, 4294901760
        %v1584 = vsub.f32 %v1582, %v1583
        %v1585 = vand.u32 %v1584, 4294901760
        %1586 = vmatpush1.msra.mxu0 %v1585
        %1587 = vmatprep.subr.mxu0 0.0
        %v1588 = vand.u32 %v384, 4294901760
        %v1589 = vsub.f32 %v384, %v1588
        %v1590 = vand.u32 %v1589, 4294901760
        %v1591 = vsub.f32 %v1589, %v1590
        %v1592 = vand.u32 %v1591, 4294901760
        %1593 = vmatpush1.msra.mxu0 %v1592
        %1594 = vmatprep.subr.mxu0 0.0
        %v1595 = vand.u32 %v385, 4294901760
        %v1596 = vsub.f32 %v385, %v1595
        %v1597 = vand.u32 %v1596, 4294901760
        %v1598 = vsub.f32 %v1596, %v1597
        %v1599 = vand.u32 %v1598, 4294901760
        %1600 = vmatpush1.msra.mxu0 %v1599
        %1601 = vmatprep.subr.mxu0 0.0
        %v1602 = vand.u32 %v386, 4294901760
        %v1603 = vsub.f32 %v386, %v1602
        %v1604 = vand.u32 %v1603, 4294901760
        %v1605 = vsub.f32 %v1603, %v1604
        %v1606 = vand.u32 %v1605, 4294901760
        %1607 = vmatpush1.msra.mxu0 %v1606
        %1608 = vmatprep.subr.mxu0 0.0
        %v1609 = vand.u32 %v387, 4294901760
        %v1610 = vsub.f32 %v387, %v1609
        %v1611 = vand.u32 %v1610, 4294901760
        %v1612 = vsub.f32 %v1610, %v1611
        %v1613 = vand.u32 %v1612, 4294901760
        %1614 = vmatpush1.msra.mxu0 %v1613
        %1615 = vmatprep.subr.mxu0 0.0
        %v1616 = vand.u32 %v388, 4294901760
        %v1617 = vsub.f32 %v388, %v1616
        %v1618 = vand.u32 %v1617, 4294901760
        %v1619 = vsub.f32 %v1617, %v1618
        %v1620 = vand.u32 %v1619, 4294901760
        %1621 = vmatpush1.msra.mxu0 %v1620
        %1622 = vmatprep.subr.mxu0 0.0
        %v1623 = vand.u32 %v389, 4294901760
        %v1624 = vsub.f32 %v389, %v1623
        %v1625 = vand.u32 %v1624, 4294901760
        %v1626 = vsub.f32 %v1624, %v1625
        %v1627 = vand.u32 %v1626, 4294901760
        %1628 = vmatpush1.msra.mxu0 %v1627
        %1629 = vmatprep.subr.mxu0 0.0
        %v1630 = vand.u32 %v390, 4294901760
        %v1631 = vsub.f32 %v390, %v1630
        %v1632 = vand.u32 %v1631, 4294901760
        %v1633 = vsub.f32 %v1631, %v1632
        %v1634 = vand.u32 %v1633, 4294901760
        %1635 = vmatpush1.msra.mxu0 %v1634
        %1636 = vmatprep.subr.mxu0 0.0
        %v1637 = vand.u32 %v391, 4294901760
        %v1638 = vsub.f32 %v391, %v1637
        %v1639 = vand.u32 %v1638, 4294901760
        %v1640 = vsub.f32 %v1638, %v1639
        %v1641 = vand.u32 %v1640, 4294901760
        %1642 = vmatpush1.msra.mxu0 %v1641
        %1643 = vmatprep.subr.mxu0 0.0
        %v1644 = vand.u32 %v392, 4294901760
        %v1645 = vsub.f32 %v392, %v1644
        %v1646 = vand.u32 %v1645, 4294901760
        %v1647 = vsub.f32 %v1645, %v1646
        %v1648 = vand.u32 %v1647, 4294901760
        %1649 = vmatpush1.msra.mxu0 %v1648
        %1650 = vmatprep.subr.mxu0 0.0
        %v1651 = vand.u32 %v393, 4294901760
        %v1652 = vsub.f32 %v393, %v1651
        %v1653 = vand.u32 %v1652, 4294901760
        %v1654 = vsub.f32 %v1652, %v1653
        %v1655 = vand.u32 %v1654, 4294901760
        %1656 = vmatpush1.msra.mxu0 %v1655
        %1657 = vmatprep.subr.mxu0 0.0
        %v1658 = vand.u32 %v394, 4294901760
        %v1659 = vsub.f32 %v394, %v1658
        %v1660 = vand.u32 %v1659, 4294901760
        %v1661 = vsub.f32 %v1659, %v1660
        %v1662 = vand.u32 %v1661, 4294901760
        %1663 = vmatpush1.msra.mxu0 %v1662
        %v1664 = vand.u32 %v163, 4294901760
        %1665 = vmatprep.mubr.f32.mxu0 %v1664
        %v1666 = vand.u32 %v162, 4294901760
        %1667 = vmatmul.mubr.f32.gmra.mrb[0].mxu0 %v1666
        %v1668 = vpop.f32.mrb[0].mxu0
        %v1669 = vadd.f32 %v1422, %v1668
        %v1670 = vpop.f32.mrb[0].mxu0
        %v1671 = vand.u32 %v165, 4294901760
        %1672 = vmatprep.mubr.f32.mxu0 %v1671
        %v1673 = vand.u32 %v164, 4294901760
        %1674 = vmatmul.mubr.f32.gmra.mrb[0].mxu0 %v1673
        %v1675 = vpop.f32.mrb[0].mxu0
        %v1676 = vadd.f32 %v1437, %v1675
        %v1677 = vpop.f32.mrb[0].mxu0
        %1678 = vdwg.mxu0
        %1679 = vmatprep.subr.mxu0 0.0
        %v1680 = vand.u32 %v363, 4294901760
        %v1681 = vsub.f32 %v363, %v1680
        %1682 = vmatpush1.msra.mxu0 %v1681
        %1683 = vmatprep.subr.mxu0 0.0
        %v1684 = vand.u32 %v364, 4294901760
        %v1685 = vsub.f32 %v364, %v1684
        %1686 = vmatpush1.msra.mxu0 %v1685
        %1687 = vmatprep.subr.mxu0 0.0
        %v1688 = vand.u32 %v365, 4294901760
        %v1689 = vsub.f32 %v365, %v1688
        %1690 = vmatpush1.msra.mxu0 %v1689
        %1691 = vmatprep.subr.mxu0 0.0
        %v1692 = vand.u32 %v366, 4294901760
        %v1693 = vsub.f32 %v366, %v1692
        %1694 = vmatpush1.msra.mxu0 %v1693
        %1695 = vmatprep.subr.mxu0 0.0
        %v1696 = vand.u32 %v367, 4294901760
        %v1697 = vsub.f32 %v367, %v1696
        %1698 = vmatpush1.msra.mxu0 %v1697
        %1699 = vmatprep.subr.mxu0 0.0
        %v1700 = vand.u32 %v368, 4294901760
        %v1701 = vsub.f32 %v368, %v1700
        %1702 = vmatpush1.msra.mxu0 %v1701
        %1703 = vmatprep.subr.mxu0 0.0
        %v1704 = vand.u32 %v369, 4294901760
        %v1705 = vsub.f32 %v369, %v1704
        %1706 = vmatpush1.msra.mxu0 %v1705
        %1707 = vmatprep.subr.mxu0 0.0
        %v1708 = vand.u32 %v370, 4294901760
        %v1709 = vsub.f32 %v370, %v1708
        %1710 = vmatpush1.msra.mxu0 %v1709
        %1711 = vmatprep.subr.mxu0 0.0
        %v1712 = vand.u32 %v371, 4294901760
        %v1713 = vsub.f32 %v371, %v1712
        %1714 = vmatpush1.msra.mxu0 %v1713
        %1715 = vmatprep.subr.mxu0 0.0
        %v1716 = vand.u32 %v372, 4294901760
        %v1717 = vsub.f32 %v372, %v1716
        %1718 = vmatpush1.msra.mxu0 %v1717
        %1719 = vmatprep.subr.mxu0 0.0
        %v1720 = vand.u32 %v373, 4294901760
        %v1721 = vsub.f32 %v373, %v1720
        %1722 = vmatpush1.msra.mxu0 %v1721
        %1723 = vmatprep.subr.mxu0 0.0
        %v1724 = vand.u32 %v374, 4294901760
        %v1725 = vsub.f32 %v374, %v1724
        %1726 = vmatpush1.msra.mxu0 %v1725
        %1727 = vmatprep.subr.mxu0 0.0
        %v1728 = vand.u32 %v375, 4294901760
        %v1729 = vsub.f32 %v375, %v1728
        %1730 = vmatpush1.msra.mxu0 %v1729
        %1731 = vmatprep.subr.mxu0 0.0
        %v1732 = vand.u32 %v376, 4294901760
        %v1733 = vsub.f32 %v376, %v1732
        %1734 = vmatpush1.msra.mxu0 %v1733
        %1735 = vmatprep.subr.mxu0 0.0
        %v1736 = vand.u32 %v377, 4294901760
        %v1737 = vsub.f32 %v377, %v1736
        %1738 = vmatpush1.msra.mxu0 %v1737
        %1739 = vmatprep.subr.mxu0 0.0
        %v1740 = vand.u32 %v378, 4294901760
        %v1741 = vsub.f32 %v378, %v1740
        %1742 = vmatpush1.msra.mxu0 %v1741
        %1743 = vmatprep.subr.mxu0 0.0
        %v1744 = vand.u32 %v379, 4294901760
        %v1745 = vsub.f32 %v379, %v1744
        %1746 = vmatpush1.msra.mxu0 %v1745
        %1747 = vmatprep.subr.mxu0 0.0
        %v1748 = vand.u32 %v380, 4294901760
        %v1749 = vsub.f32 %v380, %v1748
        %1750 = vmatpush1.msra.mxu0 %v1749
        %1751 = vmatprep.subr.mxu0 0.0
        %v1752 = vand.u32 %v381, 4294901760
        %v1753 = vsub.f32 %v381, %v1752
        %1754 = vmatpush1.msra.mxu0 %v1753
        %1755 = vmatprep.subr.mxu0 0.0
        %v1756 = vand.u32 %v382, 4294901760
        %v1757 = vsub.f32 %v382, %v1756
        %1758 = vmatpush1.msra.mxu0 %v1757
        %1759 = vmatprep.subr.mxu0 0.0
        %v1760 = vand.u32 %v383, 4294901760
        %v1761 = vsub.f32 %v383, %v1760
        %1762 = vmatpush1.msra.mxu0 %v1761
        %1763 = vmatprep.subr.mxu0 0.0
        %v1764 = vand.u32 %v384, 4294901760
        %v1765 = vsub.f32 %v384, %v1764
        %1766 = vmatpush1.msra.mxu0 %v1765
        %1767 = vmatprep.subr.mxu0 0.0
        %v1768 = vand.u32 %v385, 4294901760
        %v1769 = vsub.f32 %v385, %v1768
        %1770 = vmatpush1.msra.mxu0 %v1769
        %1771 = vmatprep.subr.mxu0 0.0
        %v1772 = vand.u32 %v386, 4294901760
        %v1773 = vsub.f32 %v386, %v1772
        %1774 = vmatpush1.msra.mxu0 %v1773
        %1775 = vmatprep.subr.mxu0 0.0
        %v1776 = vand.u32 %v387, 4294901760
        %v1777 = vsub.f32 %v387, %v1776
        %1778 = vmatpush1.msra.mxu0 %v1777
        %1779 = vmatprep.subr.mxu0 0.0
        %v1780 = vand.u32 %v388, 4294901760
        %v1781 = vsub.f32 %v388, %v1780
        %1782 = vmatpush1.msra.mxu0 %v1781
        %1783 = vmatprep.subr.mxu0 0.0
        %v1784 = vand.u32 %v389, 4294901760
        %v1785 = vsub.f32 %v389, %v1784
        %1786 = vmatpush1.msra.mxu0 %v1785
        %1787 = vmatprep.subr.mxu0 0.0
        %v1788 = vand.u32 %v390, 4294901760
        %v1789 = vsub.f32 %v390, %v1788
        %1790 = vmatpush1.msra.mxu0 %v1789
        %1791 = vmatprep.subr.mxu0 0.0
        %v1792 = vand.u32 %v391, 4294901760
        %v1793 = vsub.f32 %v391, %v1792
        %1794 = vmatpush1.msra.mxu0 %v1793
        %1795 = vmatprep.subr.mxu0 0.0
        %v1796 = vand.u32 %v392, 4294901760
        %v1797 = vsub.f32 %v392, %v1796
        %1798 = vmatpush1.msra.mxu0 %v1797
        %1799 = vmatprep.subr.mxu0 0.0
        %v1800 = vand.u32 %v393, 4294901760
        %v1801 = vsub.f32 %v393, %v1800
        %1802 = vmatpush1.msra.mxu0 %v1801
        %1803 = vmatprep.subr.mxu0 0.0
        %v1804 = vand.u32 %v394, 4294901760
        %v1805 = vsub.f32 %v394, %v1804
        %1806 = vmatpush1.msra.mxu0 %v1805
        %v1807 = vand.u32 %v163, 4294901760
        %v1808 = vsub.f32 %v163, %v1807
        %1809 = vmatprep.mubr.f32.mxu0 %v1808
        %v1810 = vand.u32 %v162, 4294901760
        %v1811 = vsub.f32 %v162, %v1810
        %1812 = vmatmul.mubr.f32.gmra.mrb[0].mxu0 %v1811
        %v1813 = vpop.f32.mrb[0].mxu0
        %v1814 = vadd.f32 %v1669, %v1813
        %v1815 = vpop.f32.mrb[0].mxu0
        %v1816 = vand.u32 %v165, 4294901760
        %v1817 = vsub.f32 %v165, %v1816
        %1818 = vmatprep.mubr.f32.mxu0 %v1817
        %v1819 = vand.u32 %v164, 4294901760
        %v1820 = vsub.f32 %v164, %v1819
        %1821 = vmatmul.mubr.f32.gmra.mrb[0].mxu0 %v1820
        %v1822 = vpop.f32.mrb[0].mxu0
        %v1823 = vadd.f32 %v1676, %v1822
        %v1824 = vpop.f32.mrb[0].mxu0
        %1825 = vdwg.mxu0
        %1826 = vmatprep.subr.mxu0 0.0
        %v1827 = vand.u32 %v363, 4294901760
        %1828 = vmatpush1.msra.mxu0 %v1827
        %1829 = vmatprep.subr.mxu0 0.0
        %v1830 = vand.u32 %v364, 4294901760
        %1831 = vmatpush1.msra.mxu0 %v1830
        %1832 = vmatprep.subr.mxu0 0.0
        %v1833 = vand.u32 %v365, 4294901760
        %1834 = vmatpush1.msra.mxu0 %v1833
        %1835 = vmatprep.subr.mxu0 0.0
        %v1836 = vand.u32 %v366, 4294901760
        %1837 = vmatpush1.msra.mxu0 %v1836
        %1838 = vmatprep.subr.mxu0 0.0
        %v1839 = vand.u32 %v367, 4294901760
        %1840 = vmatpush1.msra.mxu0 %v1839
        %1841 = vmatprep.subr.mxu0 0.0
        %v1842 = vand.u32 %v368, 4294901760
        %1843 = vmatpush1.msra.mxu0 %v1842
        %1844 = vmatprep.subr.mxu0 0.0
        %v1845 = vand.u32 %v369, 4294901760
        %1846 = vmatpush1.msra.mxu0 %v1845
        %1847 = vmatprep.subr.mxu0 0.0
        %v1848 = vand.u32 %v370, 4294901760
        %1849 = vmatpush1.msra.mxu0 %v1848
        %1850 = vmatprep.subr.mxu0 0.0
        %v1851 = vand.u32 %v371, 4294901760
        %1852 = vmatpush1.msra.mxu0 %v1851
        %1853 = vmatprep.subr.mxu0 0.0
        %v1854 = vand.u32 %v372, 4294901760
        %1855 = vmatpush1.msra.mxu0 %v1854
        %1856 = vmatprep.subr.mxu0 0.0
        %v1857 = vand.u32 %v373, 4294901760
        %1858 = vmatpush1.msra.mxu0 %v1857
        %1859 = vmatprep.subr.mxu0 0.0
        %v1860 = vand.u32 %v374, 4294901760
        %1861 = vmatpush1.msra.mxu0 %v1860
        %1862 = vmatprep.subr.mxu0 0.0
        %v1863 = vand.u32 %v375, 4294901760
        %1864 = vmatpush1.msra.mxu0 %v1863
        %1865 = vmatprep.subr.mxu0 0.0
        %v1866 = vand.u32 %v376, 4294901760
        %1867 = vmatpush1.msra.mxu0 %v1866
        %1868 = vmatprep.subr.mxu0 0.0
        %v1869 = vand.u32 %v377, 4294901760
        %1870 = vmatpush1.msra.mxu0 %v1869
        %1871 = vmatprep.subr.mxu0 0.0
        %v1872 = vand.u32 %v378, 4294901760
        %1873 = vmatpush1.msra.mxu0 %v1872
        %1874 = vmatprep.subr.mxu0 0.0
        %v1875 = vand.u32 %v379, 4294901760
        %1876 = vmatpush1.msra.mxu0 %v1875
        %1877 = vmatprep.subr.mxu0 0.0
        %v1878 = vand.u32 %v380, 4294901760
        %1879 = vmatpush1.msra.mxu0 %v1878
        %1880 = vmatprep.subr.mxu0 0.0
        %v1881 = vand.u32 %v381, 4294901760
        %1882 = vmatpush1.msra.mxu0 %v1881
        %1883 = vmatprep.subr.mxu0 0.0
        %v1884 = vand.u32 %v382, 4294901760
        %1885 = vmatpush1.msra.mxu0 %v1884
        %1886 = vmatprep.subr.mxu0 0.0
        %v1887 = vand.u32 %v383, 4294901760
        %1888 = vmatpush1.msra.mxu0 %v1887
        %1889 = vmatprep.subr.mxu0 0.0
        %v1890 = vand.u32 %v384, 4294901760
        %1891 = vmatpush1.msra.mxu0 %v1890
        %1892 = vmatprep.subr.mxu0 0.0
        %v1893 = vand.u32 %v385, 4294901760
        %1894 = vmatpush1.msra.mxu0 %v1893
        %1895 = vmatprep.subr.mxu0 0.0
        %v1896 = vand.u32 %v386, 4294901760
        %1897 = vmatpush1.msra.mxu0 %v1896
        %1898 = vmatprep.subr.mxu0 0.0
        %v1899 = vand.u32 %v387, 4294901760
        %1900 = vmatpush1.msra.mxu0 %v1899
        %1901 = vmatprep.subr.mxu0 0.0
        %v1902 = vand.u32 %v388, 4294901760
        %1903 = vmatpush1.msra.mxu0 %v1902
        %1904 = vmatprep.subr.mxu0 0.0
        %v1905 = vand.u32 %v389, 4294901760
        %1906 = vmatpush1.msra.mxu0 %v1905
        %1907 = vmatprep.subr.mxu0 0.0
        %v1908 = vand.u32 %v390, 4294901760
        %1909 = vmatpush1.msra.mxu0 %v1908
        %1910 = vmatprep.subr.mxu0 0.0
        %v1911 = vand.u32 %v391, 4294901760
        %1912 = vmatpush1.msra.mxu0 %v1911
        %1913 = vmatprep.subr.mxu0 0.0
        %v1914 = vand.u32 %v392, 4294901760
        %1915 = vmatpush1.msra.mxu0 %v1914
        %1916 = vmatprep.subr.mxu0 0.0
        %v1917 = vand.u32 %v393, 4294901760
        %1918 = vmatpush1.msra.mxu0 %v1917
        %1919 = vmatprep.subr.mxu0 0.0
        %v1920 = vand.u32 %v394, 4294901760
        %1921 = vmatpush1.msra.mxu0 %v1920
        %v1922 = vand.u32 %v163, 4294901760
        %v1923 = vsub.f32 %v163, %v1922
        %v1924 = vand.u32 %v1923, 4294901760
        %1925 = vmatprep.mubr.f32.mxu0 %v1924
        %v1926 = vand.u32 %v162, 4294901760
        %v1927 = vsub.f32 %v162, %v1926
        %v1928 = vand.u32 %v1927, 4294901760
        %1929 = vmatmul.mubr.f32.gmra.mrb[0].mxu0 %v1928
        %v1930 = vpop.f32.mrb[0].mxu0
        %v1931 = vadd.f32 %v1814, %v1930
        %v1932 = vpop.f32.mrb[0].mxu0
        %v1933 = vand.u32 %v165, 4294901760
        %v1934 = vsub.f32 %v165, %v1933
        %v1935 = vand.u32 %v1934, 4294901760
        %1936 = vmatprep.mubr.f32.mxu0 %v1935
        %v1937 = vand.u32 %v164, 4294901760
        %v1938 = vsub.f32 %v164, %v1937
        %v1939 = vand.u32 %v1938, 4294901760
        %1940 = vmatmul.mubr.f32.gmra.mrb[0].mxu0 %v1939
        %v1941 = vpop.f32.mrb[0].mxu0
        %v1942 = vadd.f32 %v1823, %v1941
        %v1943 = vpop.f32.mrb[0].mxu0
        %1944 = vdwg.mxu0
        %1945 = vmatprep.subr.mxu0 0.0
        %v1946 = vand.u32 %v363, 4294901760
        %v1947 = vsub.f32 %v363, %v1946
        %v1948 = vand.u32 %v1947, 4294901760
        %1949 = vmatpush1.msra.mxu0 %v1948
        %1950 = vmatprep.subr.mxu0 0.0
        %v1951 = vand.u32 %v364, 4294901760
        %v1952 = vsub.f32 %v364, %v1951
        %v1953 = vand.u32 %v1952, 4294901760
        %1954 = vmatpush1.msra.mxu0 %v1953
        %1955 = vmatprep.subr.mxu0 0.0
        %v1956 = vand.u32 %v365, 4294901760
        %v1957 = vsub.f32 %v365, %v1956
        %v1958 = vand.u32 %v1957, 4294901760
        %1959 = vmatpush1.msra.mxu0 %v1958
        %1960 = vmatprep.subr.mxu0 0.0
        %v1961 = vand.u32 %v366, 4294901760
        %v1962 = vsub.f32 %v366, %v1961
        %v1963 = vand.u32 %v1962, 4294901760
        %1964 = vmatpush1.msra.mxu0 %v1963
        %1965 = vmatprep.subr.mxu0 0.0
        %v1966 = vand.u32 %v367, 4294901760
        %v1967 = vsub.f32 %v367, %v1966
        %v1968 = vand.u32 %v1967, 4294901760
        %1969 = vmatpush1.msra.mxu0 %v1968
        %1970 = vmatprep.subr.mxu0 0.0
        %v1971 = vand.u32 %v368, 4294901760
        %v1972 = vsub.f32 %v368, %v1971
        %v1973 = vand.u32 %v1972, 4294901760
        %1974 = vmatpush1.msra.mxu0 %v1973
        %1975 = vmatprep.subr.mxu0 0.0
        %v1976 = vand.u32 %v369, 4294901760
        %v1977 = vsub.f32 %v369, %v1976
        %v1978 = vand.u32 %v1977, 4294901760
        %1979 = vmatpush1.msra.mxu0 %v1978
        %1980 = vmatprep.subr.mxu0 0.0
        %v1981 = vand.u32 %v370, 4294901760
        %v1982 = vsub.f32 %v370, %v1981
        %v1983 = vand.u32 %v1982, 4294901760
        %1984 = vmatpush1.msra.mxu0 %v1983
        %1985 = vmatprep.subr.mxu0 0.0
        %v1986 = vand.u32 %v371, 4294901760
        %v1987 = vsub.f32 %v371, %v1986
        %v1988 = vand.u32 %v1987, 4294901760
        %1989 = vmatpush1.msra.mxu0 %v1988
        %1990 = vmatprep.subr.mxu0 0.0
        %v1991 = vand.u32 %v372, 4294901760
        %v1992 = vsub.f32 %v372, %v1991
        %v1993 = vand.u32 %v1992, 4294901760
        %1994 = vmatpush1.msra.mxu0 %v1993
        %1995 = vmatprep.subr.mxu0 0.0
        %v1996 = vand.u32 %v373, 4294901760
        %v1997 = vsub.f32 %v373, %v1996
        %v1998 = vand.u32 %v1997, 4294901760
        %1999 = vmatpush1.msra.mxu0 %v1998
        %2000 = vmatprep.subr.mxu0 0.0
        %v2001 = vand.u32 %v374, 4294901760
        %v2002 = vsub.f32 %v374, %v2001
        %v2003 = vand.u32 %v2002, 4294901760
        %2004 = vmatpush1.msra.mxu0 %v2003
        %2005 = vmatprep.subr.mxu0 0.0
        %v2006 = vand.u32 %v375, 4294901760
        %v2007 = vsub.f32 %v375, %v2006
        %v2008 = vand.u32 %v2007, 4294901760
        %2009 = vmatpush1.msra.mxu0 %v2008
        %2010 = vmatprep.subr.mxu0 0.0
        %v2011 = vand.u32 %v376, 4294901760
        %v2012 = vsub.f32 %v376, %v2011
        %v2013 = vand.u32 %v2012, 4294901760
        %2014 = vmatpush1.msra.mxu0 %v2013
        %2015 = vmatprep.subr.mxu0 0.0
        %v2016 = vand.u32 %v377, 4294901760
        %v2017 = vsub.f32 %v377, %v2016
        %v2018 = vand.u32 %v2017, 4294901760
        %2019 = vmatpush1.msra.mxu0 %v2018
        %2020 = vmatprep.subr.mxu0 0.0
        %v2021 = vand.u32 %v378, 4294901760
        %v2022 = vsub.f32 %v378, %v2021
        %v2023 = vand.u32 %v2022, 4294901760
        %2024 = vmatpush1.msra.mxu0 %v2023
        %2025 = vmatprep.subr.mxu0 0.0
        %v2026 = vand.u32 %v379, 4294901760
        %v2027 = vsub.f32 %v379, %v2026
        %v2028 = vand.u32 %v2027, 4294901760
        %2029 = vmatpush1.msra.mxu0 %v2028
        %2030 = vmatprep.subr.mxu0 0.0
        %v2031 = vand.u32 %v380, 4294901760
        %v2032 = vsub.f32 %v380, %v2031
        %v2033 = vand.u32 %v2032, 4294901760
        %2034 = vmatpush1.msra.mxu0 %v2033
        %2035 = vmatprep.subr.mxu0 0.0
        %v2036 = vand.u32 %v381, 4294901760
        %v2037 = vsub.f32 %v381, %v2036
        %v2038 = vand.u32 %v2037, 4294901760
        %2039 = vmatpush1.msra.mxu0 %v2038
        %2040 = vmatprep.subr.mxu0 0.0
        %v2041 = vand.u32 %v382, 4294901760
        %v2042 = vsub.f32 %v382, %v2041
        %v2043 = vand.u32 %v2042, 4294901760
        %2044 = vmatpush1.msra.mxu0 %v2043
        %2045 = vmatprep.subr.mxu0 0.0
        %v2046 = vand.u32 %v383, 4294901760
        %v2047 = vsub.f32 %v383, %v2046
        %v2048 = vand.u32 %v2047, 4294901760
        %2049 = vmatpush1.msra.mxu0 %v2048
        %2050 = vmatprep.subr.mxu0 0.0
        %v2051 = vand.u32 %v384, 4294901760
        %v2052 = vsub.f32 %v384, %v2051
        %v2053 = vand.u32 %v2052, 4294901760
        %2054 = vmatpush1.msra.mxu0 %v2053
        %2055 = vmatprep.subr.mxu0 0.0
        %v2056 = vand.u32 %v385, 4294901760
        %v2057 = vsub.f32 %v385, %v2056
        %v2058 = vand.u32 %v2057, 4294901760
        %2059 = vmatpush1.msra.mxu0 %v2058
        %2060 = vmatprep.subr.mxu0 0.0
        %v2061 = vand.u32 %v386, 4294901760
        %v2062 = vsub.f32 %v386, %v2061
        %v2063 = vand.u32 %v2062, 4294901760
        %2064 = vmatpush1.msra.mxu0 %v2063
        %2065 = vmatprep.subr.mxu0 0.0
        %v2066 = vand.u32 %v387, 4294901760
        %v2067 = vsub.f32 %v387, %v2066
        %v2068 = vand.u32 %v2067, 4294901760
        %2069 = vmatpush1.msra.mxu0 %v2068
        %2070 = vmatprep.subr.mxu0 0.0
        %v2071 = vand.u32 %v388, 4294901760
        %v2072 = vsub.f32 %v388, %v2071
        %v2073 = vand.u32 %v2072, 4294901760
        %2074 = vmatpush1.msra.mxu0 %v2073
        %2075 = vmatprep.subr.mxu0 0.0
        %v2076 = vand.u32 %v389, 4294901760
        %v2077 = vsub.f32 %v389, %v2076
        %v2078 = vand.u32 %v2077, 4294901760
        %2079 = vmatpush1.msra.mxu0 %v2078
        %2080 = vmatprep.subr.mxu0 0.0
        %v2081 = vand.u32 %v390, 4294901760
        %v2082 = vsub.f32 %v390, %v2081
        %v2083 = vand.u32 %v2082, 4294901760
        %2084 = vmatpush1.msra.mxu0 %v2083
        %2085 = vmatprep.subr.mxu0 0.0
        %v2086 = vand.u32 %v391, 4294901760
        %v2087 = vsub.f32 %v391, %v2086
        %v2088 = vand.u32 %v2087, 4294901760
        %2089 = vmatpush1.msra.mxu0 %v2088
        %2090 = vmatprep.subr.mxu0 0.0
        %v2091 = vand.u32 %v392, 4294901760
        %v2092 = vsub.f32 %v392, %v2091
        %v2093 = vand.u32 %v2092, 4294901760
        %2094 = vmatpush1.msra.mxu0 %v2093
        %2095 = vmatprep.subr.mxu0 0.0
        %v2096 = vand.u32 %v393, 4294901760
        %v2097 = vsub.f32 %v393, %v2096
        %v2098 = vand.u32 %v2097, 4294901760
        %2099 = vmatpush1.msra.mxu0 %v2098
        %2100 = vmatprep.subr.mxu0 0.0
        %v2101 = vand.u32 %v394, 4294901760
        %v2102 = vsub.f32 %v394, %v2101
        %v2103 = vand.u32 %v2102, 4294901760
        %2104 = vmatpush1.msra.mxu0 %v2103
        %v2105 = vand.u32 %v163, 4294901760
        %2106 = vmatprep.mubr.f32.mxu0 %v2105
        %v2107 = vand.u32 %v162, 4294901760
        %2108 = vmatmul.mubr.f32.gmra.mrb[0].mxu0 %v2107
        %v2109 = vpop.f32.mrb[0].mxu0
        %v2110 = vadd.f32 %v1931, %v2109
        %v2111 = vpop.f32.mrb[0].mxu0
        %v2112 = vand.u32 %v165, 4294901760
        %2113 = vmatprep.mubr.f32.mxu0 %v2112
        %v2114 = vand.u32 %v164, 4294901760
        %2115 = vmatmul.mubr.f32.gmra.mrb[0].mxu0 %v2114
        %v2116 = vpop.f32.mrb[0].mxu0
        %v2117 = vadd.f32 %v1942, %v2116
        %v2118 = vpop.f32.mrb[0].mxu0
        %2119 = vdwg.mxu0
        %2120 = vmatprep.subr.mxu0 0.0
        %v2121 = vand.u32 %v363, 4294901760
        %2122 = vmatpush1.msra.mxu0 %v2121
        %2123 = vmatprep.subr.mxu0 0.0
        %v2124 = vand.u32 %v364, 4294901760
        %2125 = vmatpush1.msra.mxu0 %v2124
        %2126 = vmatprep.subr.mxu0 0.0
        %v2127 = vand.u32 %v365, 4294901760
        %2128 = vmatpush1.msra.mxu0 %v2127
        %2129 = vmatprep.subr.mxu0 0.0
        %v2130 = vand.u32 %v366, 4294901760
        %2131 = vmatpush1.msra.mxu0 %v2130
        %2132 = vmatprep.subr.mxu0 0.0
        %v2133 = vand.u32 %v367, 4294901760
        %2134 = vmatpush1.msra.mxu0 %v2133
        %2135 = vmatprep.subr.mxu0 0.0
        %v2136 = vand.u32 %v368, 4294901760
        %2137 = vmatpush1.msra.mxu0 %v2136
        %2138 = vmatprep.subr.mxu0 0.0
        %v2139 = vand.u32 %v369, 4294901760
        %2140 = vmatpush1.msra.mxu0 %v2139
        %2141 = vmatprep.subr.mxu0 0.0
        %v2142 = vand.u32 %v370, 4294901760
        %2143 = vmatpush1.msra.mxu0 %v2142
        %2144 = vmatprep.subr.mxu0 0.0
        %v2145 = vand.u32 %v371, 4294901760
        %2146 = vmatpush1.msra.mxu0 %v2145
        %2147 = vmatprep.subr.mxu0 0.0
        %v2148 = vand.u32 %v372, 4294901760
        %2149 = vmatpush1.msra.mxu0 %v2148
        %2150 = vmatprep.subr.mxu0 0.0
        %v2151 = vand.u32 %v373, 4294901760
        %2152 = vmatpush1.msra.mxu0 %v2151
        %2153 = vmatprep.subr.mxu0 0.0
        %v2154 = vand.u32 %v374, 4294901760
        %2155 = vmatpush1.msra.mxu0 %v2154
        %2156 = vmatprep.subr.mxu0 0.0
        %v2157 = vand.u32 %v375, 4294901760
        %2158 = vmatpush1.msra.mxu0 %v2157
        %2159 = vmatprep.subr.mxu0 0.0
        %v2160 = vand.u32 %v376, 4294901760
        %2161 = vmatpush1.msra.mxu0 %v2160
        %2162 = vmatprep.subr.mxu0 0.0
        %v2163 = vand.u32 %v377, 4294901760
        %2164 = vmatpush1.msra.mxu0 %v2163
        %2165 = vmatprep.subr.mxu0 0.0
        %v2166 = vand.u32 %v378, 4294901760
        %2167 = vmatpush1.msra.mxu0 %v2166
        %2168 = vmatprep.subr.mxu0 0.0
        %v2169 = vand.u32 %v379, 4294901760
        %2170 = vmatpush1.msra.mxu0 %v2169
        %2171 = vmatprep.subr.mxu0 0.0
        %v2172 = vand.u32 %v380, 4294901760
        %2173 = vmatpush1.msra.mxu0 %v2172
        %2174 = vmatprep.subr.mxu0 0.0
        %v2175 = vand.u32 %v381, 4294901760
        %2176 = vmatpush1.msra.mxu0 %v2175
        %2177 = vmatprep.subr.mxu0 0.0
        %v2178 = vand.u32 %v382, 4294901760
        %2179 = vmatpush1.msra.mxu0 %v2178
        %2180 = vmatprep.subr.mxu0 0.0
        %v2181 = vand.u32 %v383, 4294901760
        %2182 = vmatpush1.msra.mxu0 %v2181
        %2183 = vmatprep.subr.mxu0 0.0
        %v2184 = vand.u32 %v384, 4294901760
        %2185 = vmatpush1.msra.mxu0 %v2184
        %2186 = vmatprep.subr.mxu0 0.0
        %v2187 = vand.u32 %v385, 4294901760
        %2188 = vmatpush1.msra.mxu0 %v2187
        %2189 = vmatprep.subr.mxu0 0.0
        %v2190 = vand.u32 %v386, 4294901760
        %2191 = vmatpush1.msra.mxu0 %v2190
        %2192 = vmatprep.subr.mxu0 0.0
        %v2193 = vand.u32 %v387, 4294901760
        %2194 = vmatpush1.msra.mxu0 %v2193
        %2195 = vmatprep.subr.mxu0 0.0
        %v2196 = vand.u32 %v388, 4294901760
        %2197 = vmatpush1.msra.mxu0 %v2196
        %2198 = vmatprep.subr.mxu0 0.0
        %v2199 = vand.u32 %v389, 4294901760
        %2200 = vmatpush1.msra.mxu0 %v2199
        %2201 = vmatprep.subr.mxu0 0.0
        %v2202 = vand.u32 %v390, 4294901760
        %2203 = vmatpush1.msra.mxu0 %v2202
        %2204 = vmatprep.subr.mxu0 0.0
        %v2205 = vand.u32 %v391, 4294901760
        %2206 = vmatpush1.msra.mxu0 %v2205
        %2207 = vmatprep.subr.mxu0 0.0
        %v2208 = vand.u32 %v392, 4294901760
        %2209 = vmatpush1.msra.mxu0 %v2208
        %2210 = vmatprep.subr.mxu0 0.0
        %v2211 = vand.u32 %v393, 4294901760
        %2212 = vmatpush1.msra.mxu0 %v2211
        %2213 = vmatprep.subr.mxu0 0.0
        %v2214 = vand.u32 %v394, 4294901760
        %2215 = vmatpush1.msra.mxu0 %v2214
        %v2216 = vand.u32 %v163, 4294901760
        %2217 = vmatprep.mubr.f32.mxu0 %v2216
        %v2218 = vand.u32 %v162, 4294901760
        %2219 = vmatmul.mubr.f32.gmra.mrb[0].mxu0 %v2218
        %v2220 = vpop.f32.mrb[0].mxu0
        %v2221 = vadd.f32 %v2110, %v2220
        %v2222 = vpop.f32.mrb[0].mxu0
        %v2223 = vand.u32 %v165, 4294901760
        %2224 = vmatprep.mubr.f32.mxu0 %v2223
        %v2225 = vand.u32 %v164, 4294901760
        %2226 = vmatmul.mubr.f32.gmra.mrb[0].mxu0 %v2225
        %v2227 = vpop.f32.mrb[0].mxu0
        %v2228 = vadd.f32 %v2117, %v2227
        %v2229 = vpop.f32.mrb[0].mxu0
        %2230 = vdwg.mxu0
        %v2231 = vadd.f32 %v1303, %v2221
        %v2232 = vadd.f32 %v1310, %v2228
        %v2233 = vand.u32 2147483647, %v1303
        %vm2234 = vcmp.le.f32.partialorder %v2233, 0.7853982
        %vm2235 = vcmp.lt.s32.totalorder %v1303, 0
        %v2236 = vand.u32 %v1303, 2139095040
        %v2237 = vshrl.u32 %v2236, 23
        %v2238 = vsub.s32 %v2237, 127
        %v2239 = vand.u32 2147483647, %v1303
        %v2240 = vand.u32 %v2239, 8388607
        %v2241 = vor.u32 %v2240, 8388608
        %v2242 = vsub.s32 0, %v2241
        %v2243 = vadd.s32 %v2238, 1
        %vm2244 = vcmp.gt.s32.totalorder %v2243, 0
        %v2245 = vsel %vm2244, %v2243, 0
        %v2246 = vshrl.u32 %v2245, 5
        %v2247 = vand.u32 %v2245, 31
        %v2248 = vsub.s32 32, %v2247
        %v2249 = vshrl.u32 683565275, %v2248
        %v2250 = vshll.u32 683565275, %v2247
        %v2251 = vshrl.u32 2475754826, %v2248
        %v2252 = vor.u32 %v2250, %v2251
        %v2253 = vshll.u32 2475754826, %v2247
        %v2254 = vshrl.u32 2131351028, %v2248
        %v2255 = vor.u32 %v2253, %v2254
        %v2256 = vshll.u32 2131351028, %v2247
        %v2257 = vshrl.u32 2102212464, %v2248
        %v2258 = vor.u32 %v2256, %v2257
        %v2259 = vshll.u32 2102212464, %v2247
        %v2260 = vshrl.u32 920167782, %v2248
        %v2261 = vor.u32 %v2259, %v2260
        %v2262 = vshll.u32 920167782, %v2247
        %v2263 = vshrl.u32 1326507024, %v2248
        %v2264 = vor.u32 %v2262, %v2263
        %vm2265 = vcmp.lt.s32.totalorder %v2246, 1
        %vm2266 = vcmp.lt.s32.totalorder %v2246, 2
        %vm2267 = vcmp.lt.s32.totalorder %v2246, 3
        %vm2268 = vcmp.lt.s32.totalorder %v2246, 4
        %v2269 = vsel %vm2265, %v2249, %v2252
        %v2270 = vsel %vm2268, %v2258, 2102212464
        %v2271 = vsel %vm2267, %v2255, %v2270
        %v2272 = vsel %vm2266, %v2269, %v2271
        %v2273 = vsel %vm2265, %v2252, %v2255
        %v2274 = vsel %vm2268, %v2261, 920167782
        %v2275 = vsel %vm2267, %v2258, %v2274
        %v2276 = vsel %vm2266, %v2273, %v2275
        %v2277 = vsel %vm2265, %v2255, %v2258
        %v2278 = vsel %vm2268, %v2264, 1326507024
        %v2279 = vsel %vm2267, %v2261, %v2278
        %v2280 = vsel %vm2266, %v2277, %v2279
        %v2281 = vshll.u32 %v2241, 8
        %v2282 = vmul.u32.u64.compose %v2281, %v2280
        %v2283 = vextract.low.u32 %v2282
        %v2284 = vextract.high.u32 %v2282
        %v2285 = vmul.u32.u64.compose %v2281, %v2276
        %v2286 = vextract.low.u32 %v2285
        %v2287 = vextract.high.u32 %v2285
        %v2288 = vmul.u32 %v2281, %v2272
        %v2289 = vadd.s32 %v2284, %v2286
        %vm2290 = vc.u32 %v2284, %v2286
        %v2291 = vadd.s32 %v2287, 1
        %v2292 = vsel %vm2290, %v2291, %v2287
        %v2293 = vadd.s32 %v2288, %v2292
        %v2294 = vadd.s32 %v2293, 536870912
        %v2295 = vshrl.u32 %v2294, 30
        %v2296 = vshll.u32 %v2295, 30
        %v2297 = vsub.s32 %v2293, %v2296
        %vm2298 = vcmp.lt.s32.totalorder %v2297, 0
        %v2299 = vsub.s32 0, %v2297
        %v2300 = vsel %vm2298, %v2299, %v2297
        %v2301 = vclz %v2300
        %v2302 = vsub.s32 %v2301, 2
        %vm2303 = vcmp.gt.s32.totalorder 0, %v2302
        %v2304 = vsel %vm2303, 0, %v2302
        %v2305 = vsub.s32 32, %v2304
        %v2306 = vshll.u32 %v2297, %v2304
        %v2307 = vshrl.u32 %v2289, %v2305
        %v2308 = vor.u32 %v2306, %v2307
        %v2309 = vsub.s32 4294967266, %v2304
        %v2310 = vadd.s32 %v2309, 127
        %v2311 = vshll.u32 %v2310, 23
        %v2312 = vor.u32 4788187, %v2311
        %v2313 = vand.u32 2147483647, %v2312
        %v2315 = vcvt.s32.f32 %v2308
        %v2316 = vmul.f32 %v2315, %v2313
        %v2317 = vxor.u32 %v2316, 2147483648
        %v2318 = vsel %vm2235, %v2317, %v2316
        %v2319 = vsub.s32 4, %v2295
        %v2320 = vsel %vm2235, %v2319, %v2295
        %v2321 = vsel %vm2234, %v1303, %v2318
        %v2322 = vsel %vm2234, 0, %v2320
        %v2323 = vcosq.f32.pop %v2321
        %v2324 = vsinq.f32.pop %v2321
        %vm2325 = vweird.f32 %v1303
        %v2326 = vand.u32 %v2322, 3
        %vm2327 = vcmp.lt.s32.totalorder %v2326, 2
        %vm2328 = vcmp.eq.s32.totalorder %v2326, 0
        %v2329 = vxor.u32 %v2324, 2147483648
        %v2330 = vsel %vm2328, %v2323, %v2329
        %vm2331 = vcmp.eq.s32.totalorder %v2326, 2
        %v2332 = vxor.u32 %v2323, 2147483648
        %v2333 = vsel %vm2331, %v2332, %v2324
        %v2334 = vsel %vm2327, %v2330, %v2333
        %v2335 = vsel %vm2325, nan, %v2334
        %v2336 = vand.u32 2147483647, %v1310
        %vm2337 = vcmp.le.f32.partialorder %v2336, 0.7853982
        %vm2338 = vcmp.lt.s32.totalorder %v1310, 0
        %v2339 = vand.u32 %v1310, 2139095040
        %v2340 = vshrl.u32 %v2339, 23
        %v2341 = vsub.s32 %v2340, 127
        %v2342 = vand.u32 2147483647, %v1310
        %v2343 = vand.u32 %v2342, 8388607
        %v2344 = vor.u32 %v2343, 8388608
        %v2345 = vsub.s32 0, %v2344
        %v2346 = vadd.s32 %v2341, 1
        %vm2347 = vcmp.gt.s32.totalorder %v2346, 0
        %v2348 = vsel %vm2347, %v2346, 0
        %v2349 = vshrl.u32 %v2348, 5
        %v2350 = vand.u32 %v2348, 31
        %v2351 = vsub.s32 32, %v2350
        %v2352 = vshrl.u32 683565275, %v2351
        %v2353 = vshll.u32 683565275, %v2350
        %v2354 = vshrl.u32 2475754826, %v2351
        %v2355 = vor.u32 %v2353, %v2354
        %v2356 = vshll.u32 2475754826, %v2350
        %v2357 = vshrl.u32 2131351028, %v2351
        %v2358 = vor.u32 %v2356, %v2357
        %v2359 = vshll.u32 2131351028, %v2350
        %v2360 = vshrl.u32 2102212464, %v2351
        %v2361 = vor.u32 %v2359, %v2360
        %v2362 = vshll.u32 2102212464, %v2350
        %v2363 = vshrl.u32 920167782, %v2351
        %v2364 = vor.u32 %v2362, %v2363
        %v2365 = vshll.u32 920167782, %v2350
        %v2366 = vshrl.u32 1326507024, %v2351
        %v2367 = vor.u32 %v2365, %v2366
        %vm2368 = vcmp.lt.s32.totalorder %v2349, 1
        %vm2369 = vcmp.lt.s32.totalorder %v2349, 2
        %vm2370 = vcmp.lt.s32.totalorder %v2349, 3
        %vm2371 = vcmp.lt.s32.totalorder %v2349, 4
        %v2372 = vsel %vm2368, %v2352, %v2355
        %v2373 = vsel %vm2371, %v2361, 2102212464
        %v2374 = vsel %vm2370, %v2358, %v2373
        %v2375 = vsel %vm2369, %v2372, %v2374
        %v2376 = vsel %vm2368, %v2355, %v2358
        %v2377 = vsel %vm2371, %v2364, 920167782
        %v2378 = vsel %vm2370, %v2361, %v2377
        %v2379 = vsel %vm2369, %v2376, %v2378
        %v2380 = vsel %vm2368, %v2358, %v2361
        %v2381 = vsel %vm2371, %v2367, 1326507024
        %v2382 = vsel %vm2370, %v2364, %v2381
        %v2383 = vsel %vm2369, %v2380, %v2382
        %v2384 = vshll.u32 %v2344, 8
        %v2385 = vmul.u32.u64.compose %v2384, %v2383
        %v2386 = vextract.low.u32 %v2385
        %v2387 = vextract.high.u32 %v2385
        %v2388 = vmul.u32.u64.compose %v2384, %v2379
        %v2389 = vextract.low.u32 %v2388
        %v2390 = vextract.high.u32 %v2388
        %v2391 = vmul.u32 %v2384, %v2375
        %v2392 = vadd.s32 %v2387, %v2389
        %vm2393 = vc.u32 %v2387, %v2389
        %v2394 = vadd.s32 %v2390, 1
        %v2395 = vsel %vm2393, %v2394, %v2390
        %v2396 = vadd.s32 %v2391, %v2395
        %v2397 = vadd.s32 %v2396, 536870912
        %v2398 = vshrl.u32 %v2397, 30
        %v2399 = vshll.u32 %v2398, 30
        %v2400 = vsub.s32 %v2396, %v2399
        %vm2401 = vcmp.lt.s32.totalorder %v2400, 0
        %v2402 = vsub.s32 0, %v2400
        %v2403 = vsel %vm2401, %v2402, %v2400
        %v2404 = vclz %v2403
        %v2405 = vsub.s32 %v2404, 2
        %vm2406 = vcmp.gt.s32.totalorder 0, %v2405
        %v2407 = vsel %vm2406, 0, %v2405
        %v2408 = vsub.s32 32, %v2407
        %v2409 = vshll.u32 %v2400, %v2407
        %v2410 = vshrl.u32 %v2392, %v2408
        %v2411 = vor.u32 %v2409, %v2410
        %v2412 = vsub.s32 4294967266, %v2407
        %v2413 = vadd.s32 %v2412, 127
        %v2414 = vshll.u32 %v2413, 23
        %v2415 = vor.u32 4788187, %v2414
        %v2416 = vand.u32 2147483647, %v2415
        %v2418 = vcvt.s32.f32 %v2411
        %v2419 = vmul.f32 %v2418, %v2416
        %v2420 = vxor.u32 %v2419, 2147483648
        %v2421 = vsel %vm2338, %v2420, %v2419
        %v2422 = vsub.s32 4, %v2398
        %v2423 = vsel %vm2338, %v2422, %v2398
        %v2424 = vsel %vm2337, %v1310, %v2421
        %v2425 = vsel %vm2337, 0, %v2423
        %v2426 = vcosq.f32.pop %v2424
        %v2427 = vsinq.f32.pop %v2424
        %vm2428 = vweird.f32 %v1310
        %v2429 = vand.u32 %v2425, 3
        %vm2430 = vcmp.lt.s32.totalorder %v2429, 2
        %vm2431 = vcmp.eq.s32.totalorder %v2429, 0
        %v2432 = vxor.u32 %v2427, 2147483648
        %v2433 = vsel %vm2431, %v2426, %v2432
        %vm2434 = vcmp.eq.s32.totalorder %v2429, 2
        %v2435 = vxor.u32 %v2426, 2147483648
        %v2436 = vsel %vm2434, %v2435, %v2427
        %v2437 = vsel %vm2430, %v2433, %v2436
        %v2438 = vsel %vm2428, nan, %v2437
        %v2439 = vmul.f32 %v1303, %v2221
        %v2440 = vmul.f32 %v1310, %v2228
        %s2441 = sld [smem:[#allocation2]]
        %v2442 = vstv %s2441
        %v2443 = vmul.f32 %v2442, %v2231
        %v2444 = vmul.f32 %v2442, %v2232
        %s2445 = sld [smem:[#allocation2 + $0x1]]
        %v2446 = vstv %s2445
        %v2447 = vmul.f32 %v2446, %v2335
        %v2448 = vmul.f32 %v2446, %v2438
        %v2449 = vadd.f32 %v2443, %v2447
        %v2450 = vadd.f32 %v2444, %v2448
        %s2451 = sld [smem:[#allocation2 + $0x2]]
        %v2452 = vstv %s2451
        %v2453 = vmul.f32 %v2452, %v2439
        %v2454 = vmul.f32 %v2452, %v2440
        %v2455 = vadd.f32 %v2449, %v2453
        %v2456 = vadd.f32 %v2450, %v2454
        %s2457 = sld [smem:[#allocation2 + $0x3]]
        %v2458 = vstv %s2457
        %v2459 = vadd.f32 %v2455, %v2458
        %v2460 = vadd.f32 %v2456, %v2458
        %2461 = vst [vmem:[%s153] sm:$0xff] %v2459
        %2462 = vst [vmem:[%s153 + $0x8] sm:$0xff] %v2460
        %s2463 = sand.u32 %s72, 1
        %s2464 = scalar_lea.sflag [#allocation3], %s2463
        %s2465 = sand.u32 %s72, 1
        %s2466 = smul.addr %s2465, 16
        %s2467 = scalar_lea.vmem [#allocation5], %s2466
        // Predicated region
        $region33: #{identification_forward.1} parent=27 // pred_check
          %p2468 = pneg %p82
        $region34: #{identification_forward.1} parent=27 // pred_check_branch
          %2470 = sbr.rel (%p2468) target = $region36
        $region35: #{identification_forward.1} parent=27 // pred_region
          %s2471 = smul.u32 2, %s17
          %s2473 = ssub.s32 256, 256
          %2474 = vsyncadd %s2464, %s2473
          %s2475 = smul.addr %s2471, 128
          %s2476 = scalar_lea.hbm %s2, %s2475
          %s2477 = sshll.u32 %s2467, 4
          %s2478 = int_to_ptr.vmem [resolvable:$true] %s2477
          %2483 = dma.vmem_to_hbm [thread:$0]  %s2478, 256, %s2476, %s2464, 128, 128, 8
        $region36: #{identification_forward.1} parent=27 // pred_fallthru
          _
      $region28: #{identification_forward.1} parent=5 // pred_fallthru
        _
      %p2484 = scmp.le.s32.totalorder 2, %s12
      // Predicated region
      $region37: #{identification_forward.1} parent=5 // pred_check
        %p2485 = pneg %p2484
      $region38: #{identification_forward.1} parent=5 // pred_check_branch
        %2487 = sbr.rel (%p2485) target = $region40
      $region39: #{identification_forward.1} parent=5 // pred_region
        %s2488 = ssub.s32 %s12, 2
        // Predicated region
        $region41: #{identification_forward.1} parent=39 // pred_check
          %p2489 = pneg %p88
        $region42: #{identification_forward.1} parent=39 // pred_check_branch
          %2491 = sbr.rel (%p2489) target = $region44
        $region43: #{identification_forward.1} parent=39 // pred_region
          %s2492 = sand.u32 %s73, 1
          %s2493 = scalar_lea.sflag [#allocation3], %s2492
          %s2494 = sand.u32 %s73, 1
          %s2495 = smul.addr %s2494, 16
          %s2496 = scalar_lea.vmem [#allocation5], %s2495
          %2497 = dma.done %s2493, 256
        $region44: #{identification_forward.1} parent=39 // pred_fallthru
          _
      $region40: #{identification_forward.1} parent=5 // pred_fallthru
        _
    $region6: #{identification_forward.1} parent=1 // loop_footer
      %s16 = sadd.s32 1, %s12
    $region7: #{identification_forward.1} parent=1 // loop_footer_branch
      %11 = sbr.rel target = $region3
    $region8: #{identification_forward.1} parent=1 // loop_exit
      _
    %2498 = vsyncpa [#allocation3], 1
    %s2499 = scalar_lea.sflag [#allocation3], 1
    %2500 = vsyncpa %s2499, 1
    %2501 = vsyncpa [#allocation4], 1
    %s2502 = scalar_lea.sflag [#allocation4], 1
    %2503 = vsyncpa %s2502, 1

</llo_original>
